<compile_context>
chip_gen: v7x
topology: tpu7x:2x2x1
jax: 0.10.0
libtpu: 0.0.40
codegen_flags: <defaults>
</compile_context>

<pallas_src>
import jax
import jax.numpy as jnp
from jax import lax
from jax.experimental import pallas as pl
from jax.experimental.pallas import tpu as pltpu

# ---------------------------------------------------------------------------
# Static configuration (small, consistent with the module).
# ---------------------------------------------------------------------------
BATCH = 2
CIN = 4        # input_channel
CPAD = 8       # input channels zero-padded to 8 (sublane aligned, == HID)
HID = 8        # hidden_channel
L = 256        # sequence length (forced by `hidden_channel * int(256)`)
K = 3          # kernel_size
PAD = 1        # padding ('same', zeros padding_mode)
D1 = 20        # final_dense hidden width
HALO = 128     # lane apron of the halo scratch (keeps the center store 128-aligned)

assert CPAD == HID  # the halo / tap-stack scratches are reused for every layer


# ---------------------------------------------------------------------------
# Pallas kernel: full forward pass for the batch elements of this grid step.
# ---------------------------------------------------------------------------
def pilati_kernel(x_ref, wslab_ref, bslab_ref, wd1_ref, tail_ref, o_ref,
                  pad_ref, stk_ref):
    nl = x_ref.shape[1]          # lanes handled by this step (nb * L)
    nb = nl // L                 # batch elements in this step

    # Per-position boundary masks (also zero the batch seam, since batch is
    # stacked along the lane axis).  One mask pair serves all 5 layers.
    pos = lax.broadcasted_iota(jnp.int32, (CPAD, nl), 1) % L
    first = pos == 0
    last = pos == (L - 1)

    # Zero the halo buffer once; only the 128-lane aprons need to stay zero,
    # the center is overwritten every layer.
    pad_ref[...] = jnp.zeros(pad_ref.shape, pad_ref.dtype)

    def conv_relu(y, layer):
        # y: (CPAD, nl) f32 activations of the previous layer.
        pad_ref[:, HALO:HALO + nl] = y                                   # aligned store
        y_m1 = jnp.where(first, 0.0, pad_ref[:, HALO - 1:HALO - 1 + nl])  # x[:, l-1]
        y_p1 = jnp.where(last, 0.0, pad_ref[:, HALO + 1:HALO + 1 + nl])   # x[:, l+1]
        # Tap-stacked matmul RHS, written at 8-aligned sublane offsets.
        stk_ref[0 * CPAD:1 * CPAD, :] = y_m1
        stk_ref[1 * CPAD:2 * CPAD, :] = y
        stk_ref[2 * CPAD:3 * CPAD, :] = y_p1
        rhs = stk_ref[...].astype(jnp.bfloat16)                          # (K*CPAD, nl)
        z = jnp.dot(wslab_ref[layer], rhs,                               # (HID, nl) f32
                    preferred_element_type=jnp.float32)
        return jnp.maximum(z + bslab_ref[layer], 0.0)                    # bias + ReLU

    y = x_ref[...]
    for layer in range(5):        # model_1 .. model_5
        y = conv_relu(y, layer)   # (HID, nl)

    # Flatten (torch order h*L + l) + Linear(HID*L -> 20) as a batched matmul
    # over HID (batch dim h, contraction over l), then a cheap sum over h.
    lhs = y.reshape(HID, nb, L).astype(jnp.bfloat16)                     # free relabel
    parts = jnp.einsum('hnl,hdl->hnd', lhs, wd1_ref[...],
                       preferred_element_type=jnp.float32)               # (HID, nb, D1)
    h1 = jnp.sum(parts, axis=0) + tail_ref[0:1, :]                       # (nb, D1)
    h1 = jnp.maximum(h1, 0.0)                                            # ReLU

    # Linear(20 -> 1) on the VPU (no MXU push for a 1-wide output).
    out = jnp.sum(h1 * tail_ref[1:2, :], axis=1, keepdims=True) + tail_ref[2:3, 0:1]
    o_ref[...] = out.reshape(1, nb, 1).astype(o_ref.dtype)


# ---------------------------------------------------------------------------
# One-time parameter packing (outside the hot path).
# ---------------------------------------------------------------------------
def pack_params(params):
    (cw1, cb1, cw2, cb2, cw3, cb3, cw4, cb4, cw5, cb5, wd1, bd1, wd2, bd2) = params

    # Conv1 input channels zero-padded 4 -> 8 (matching the padded input).
    cw1p = jnp.pad(cw1, ((0, 0), (0, CPAD - CIN), (0, 0)))

    def fuse(w):   # torch (Cout, Cin=8, K) -> (Cout, K*8); column k*8 + ci = w[:, ci, k]
        return jnp.transpose(w, (0, 2, 1)).reshape(HID, K * CPAD)

    wslab = jnp.stack([fuse(cw1p), fuse(cw2), fuse(cw3), fuse(cw4), fuse(cw5)],
                      axis=0).astype(jnp.bfloat16)                       # (5, HID, K*CPAD)
    bslab = jnp.stack([cb1, cb2, cb3, cb4, cb5], axis=0).reshape(5, HID, 1)  # f32

    # Dense 1: torch (D1, HID*L) -> (HID, D1, L): wd1_r[h, d, l] = wd1[d, h*L + l].
    wd1_r = wd1.reshape(D1, HID, L).transpose(1, 0, 2).astype(jnp.bfloat16)

    # Small dense tail packed into one (3, D1) f32 tensor: [bd1; wd2; bd2(padded)].
    tail = jnp.concatenate(
        [bd1.reshape(1, D1), wd2.reshape(1, D1),
         jnp.pad(bd2.reshape(1, 1), ((0, 0), (0, D1 - 1)))], axis=0)

    return (wslab, bslab, wd1_r, tail)


# ---------------------------------------------------------------------------
# Wrapper: input packing + pallas_call.
# ---------------------------------------------------------------------------
def pilati_forward(x, packed, *, batch_tiles=1):
    """x: (N, CIN, L) float32 (PyTorch Conv1d layout).
    batch_tiles=1 for single-TensorCore chips (v5e/v6e); batch_tiles=2 shards the
    batch over the two v7x TensorCores ("parallel" grid axis)."""
    wslab, bslab, wd1_r, tail = packed
    N = x.shape[0]
    assert (N, x.shape[1], x.shape[2]) == (BATCH, CIN, L)
    assert N % batch_tiles == 0
    nb = N // batch_tiles
    nl = nb * L

    # (N, CIN, L) -> pad channels to 8 -> (CPAD, N*L), batch stacked along lanes.
    xp = jnp.pad(x, ((0, 0), (0, CPAD - CIN), (0, 0)))
    x2 = jnp.transpose(xp, (1, 0, 2)).reshape(CPAD, N * L)

    flops = (2 * HID * (K * CPAD) * N * L * 5        # 5 conv matmuls
             + 2 * HID * L * D1 * N + 2 * D1 * N)    # dense layers
    bytes_accessed = (x2.size * 4 + wslab.size * 2 + bslab.size * 4
                      + wd1_r.size * 2 + tail.size * 4 + N * 4)

    grid_spec = pltpu.PrefetchScalarGridSpec(
        num_scalar_prefetch=0,
        grid=(batch_tiles,),
        in_specs=[
            pl.BlockSpec((CPAD, nl), lambda t: (0, t)),            # activations (per tile)
            pl.BlockSpec((5, HID, K * CPAD), lambda t: (0, 0, 0)),  # fused conv weights
            pl.BlockSpec((5, HID, 1), lambda t: (0, 0, 0)),         # fused conv biases
            pl.BlockSpec((HID, D1, L), lambda t: (0, 0, 0)),        # dense-1 weights
            pl.BlockSpec((3, D1), lambda t: (0, 0)),                # bd1 / wd2 / bd2
        ],
        out_specs=pl.BlockSpec((1, nb, 1), lambda t: (t, 0, 0)),
        scratch_shapes=[
            pltpu.VMEM((CPAD, nl + 2 * HALO), jnp.float32),   # zero-haloed activation slab
            pltpu.VMEM((K * CPAD, nl), jnp.float32),          # tap-stacked matmul RHS
        ],
    )

    out = pl.pallas_call(
        pilati_kernel,
        out_shape=jax.ShapeDtypeStruct((batch_tiles, nb, 1), jnp.float32),
        grid_spec=grid_spec,
        compiler_params=pltpu.CompilerParams(
            dimension_semantics=("parallel",)),
        cost_estimate=pl.CostEstimate(flops=flops, transcendentals=0,
                                      bytes_accessed=bytes_accessed),
    )(x2, wslab, bslab, wd1_r, tail)
    return out.reshape(N, 1)


# ---------------------------------------------------------------------------
# Deterministic parameter init (synthetic; torch-shaped weights).
# ---------------------------------------------------------------------------
def init_params(key):
    keys = jax.random.split(key, 14)

    def rnd(k, shape, scale):
        return scale * jax.random.normal(k, shape, dtype=jnp.float32)

    cw1 = rnd(keys[0], (HID, CIN, K), 0.2)
    cb1 = rnd(keys[1], (HID,), 0.1)
    cw2 = rnd(keys[2], (HID, HID, K), 0.2)
    cb2 = rnd(keys[3], (HID,), 0.1)
    cw3 = rnd(keys[4], (HID, HID, K), 0.2)
    cb3 = rnd(keys[5], (HID,), 0.1)
    cw4 = rnd(keys[6], (HID, HID, K), 0.2)
    cb4 = rnd(keys[7], (HID,), 0.1)
    cw5 = rnd(keys[8], (HID, HID, K), 0.2)
    cb5 = rnd(keys[9], (HID,), 0.1)
    wd1 = rnd(keys[10], (D1, HID * L), 0.02)
    bd1 = rnd(keys[11], (D1,), 0.1)
    wd2 = rnd(keys[12], (1, D1), 0.2)
    bd2 = rnd(keys[13], (1,), 0.1)
    return (cw1, cb1, cw2, cb2, cw3, cb3, cw4, cb4, cw5, cb5, wd1, bd1, wd2, bd2)


# ---------------------------------------------------------------------------
# Pure-JAX reference (independent path via lax.conv_general_dilated, full f32).
# ---------------------------------------------------------------------------
def reference_forward(x, params):
    (cw1, cb1, cw2, cb2, cw3, cb3, cw4, cb4, cw5, cb5, wd1, bd1, wd2, bd2) = params
    y = x
    for w, b in ((cw1, cb1), (cw2, cb2), (cw3, cb3), (cw4, cb4), (cw5, cb5)):
        y = lax.conv_general_dilated(
            y, w, window_strides=(1,), padding=[(PAD, PAD)],
            dimension_numbers=("NCH", "OIH", "NCH"))
        y = jnp.maximum(y + b[None, :, None], 0.0)
    flat = y.reshape(y.shape[0], -1)                    # torch nn.Flatten order
    h1 = jnp.maximum(flat @ wd1.T + bd1, 0.0)
    return h1 @ wd2.T + bd2


# ---------------------------------------------------------------------------
if __name__ == "__main__":
    key = jax.random.PRNGKey(0)
    k_x, k_p = jax.random.split(key)

    x = jax.random.normal(k_x, (BATCH, CIN, L), dtype=jnp.float32)   # (N, C, L) like torch
    params = init_params(k_p)
    packed = pack_params(params)          # one-time packing, outside the hot path

    ref = jax.block_until_ready(reference_forward(x, params))

    # Default (single-TensorCore) path.
    out = jax.block_until_ready(pilati_forward(x, packed, batch_tiles=1))
    assert out.shape == (BATCH, 1), out.shape
    # bf16 MXU operands -> loosened tolerance vs the full-f32 reference.
    assert jnp.allclose(out, ref, rtol=5e-2, atol=5e-2), (out, ref)

    # v7x-style path: batch sharded over TensorCores via a parallel grid axis.
    out2 = jax.block_until_ready(pilati_forward(x, packed, batch_tiles=2))
    assert out2.shape == (BATCH, 1), out2.shape
    assert jnp.allclose(out2, ref, rtol=5e-2, atol=5e-2), (out2, ref)

    print("KERNEL_OK")
</pallas_src>

<mosaic_0001>
module attributes {stable_mosaic.version = 11 : i64} {
  func.func @pilati_kernel(%arg0: i32, %arg1: memref<8x512xf32, #tpu.memory_space<vmem>>, %arg2: memref<5x8x24xbf16, #tpu.memory_space<vmem>>, %arg3: memref<5x8x1xf32, #tpu.memory_space<vmem>>, %arg4: memref<8x20x256xbf16, #tpu.memory_space<vmem>>, %arg5: memref<3x20xf32, #tpu.memory_space<vmem>>, %arg6: memref<1x2x1xf32, #tpu.memory_space<vmem>>, %arg7: memref<8x768xf32, #tpu.memory_space<vmem>>, %arg8: memref<24x512xf32, #tpu.memory_space<vmem>>) attributes {dimension_semantics = [#tpu.dimension_semantics<parallel>], iteration_bounds = array<i64: 1>, scalar_prefetch = 0 : i64, scratch_operands = 2 : i64, tpu.core_type = #tpu.core_type<tc>, window_params = [{transform_indices = @transform_0, window_bounds = array<i64: 8, 512>}, {pipeline_mode = #tpu.pipeline_mode<synchronous>, transform_indices = @transform_1, window_bounds = array<i64: 5, 8, 24>}, {pipeline_mode = #tpu.pipeline_mode<synchronous>, transform_indices = @transform_2, window_bounds = array<i64: 5, 8, 1>}, {pipeline_mode = #tpu.pipeline_mode<synchronous>, transform_indices = @transform_3, window_bounds = array<i64: 8, 20, 256>}, {pipeline_mode = #tpu.pipeline_mode<synchronous>, transform_indices = @transform_4, window_bounds = array<i64: 3, 20>}, {transform_indices = @transform_5, window_bounds = array<i64: 1, 2, 1>}]} {
    %0 = tpu.iota {dimensions = array<i32: 1>} : vector<8x512xi32>
    %c256_i32 = arith.constant 256 : i32
    %c0_i32 = arith.constant 0 : i32
    %1 = arith.cmpi eq, %c256_i32, %c0_i32 : i32
    %c1_i32 = arith.constant 1 : i32
    %2 = arith.select %1, %c1_i32, %c256_i32 : i32
    %3 = vector.broadcast %2 : i32 to vector<8x512xi32>
    %4 = arith.remsi %0, %3 : vector<8x512xi32>
    %c0_i32_0 = arith.constant 0 : i32
    %5 = vector.broadcast %c0_i32_0 : i32 to vector<8x512xi32>
    %6 = arith.cmpi ne, %4, %5 : vector<8x512xi32>
    %c0_i32_1 = arith.constant 0 : i32
    %7 = vector.broadcast %c0_i32_1 : i32 to vector<8x512xi32>
    %8 = arith.cmpi slt, %4, %7 : vector<8x512xi32>
    %c0_i32_2 = arith.constant 0 : i32
    %9 = arith.cmpi slt, %2, %c0_i32_2 : i32
    %10 = vector.broadcast %9 : i1 to vector<8x512xi1>
    %11 = vector.broadcast %10 : vector<8x512xi1> to vector<8x512xi1>
    %12 = arith.xori %8, %11 : vector<8x512xi1>
    %13 = arith.andi %12, %6 : vector<8x512xi1>
    %14 = vector.broadcast %2 : i32 to vector<8x512xi32>
    %15 = arith.addi %4, %14 : vector<8x512xi32>
    %16 = arith.select %13, %15, %4 : vector<8x512xi1>, vector<8x512xi32>
    %c0_i32_3 = arith.constant 0 : i32
    %17 = vector.broadcast %c0_i32_3 : i32 to vector<8x512xi32>
    %18 = arith.cmpi eq, %16, %17 : vector<8x512xi32>
    %c255_i32 = arith.constant 255 : i32
    %19 = vector.broadcast %c255_i32 : i32 to vector<8x512xi32>
    %20 = arith.cmpi eq, %16, %19 : vector<8x512xi32>
    %cst = arith.constant 0.000000e+00 : f32
    %21 = vector.broadcast %cst : f32 to vector<8x768xf32>
    %c0 = arith.constant 0 : index
    %c0_4 = arith.constant 0 : index
    %22 = vector.load %arg7[%c0, %c0_4] : memref<8x768xf32, #tpu.memory_space<vmem>>, vector<8x768xf32>
    tpu.vector_store %arg7[%c0, %c0_4], %21 {strides = array<i32>} : memref<8x768xf32, #tpu.memory_space<vmem>>, vector<8x768xf32>,
    %c0_5 = arith.constant 0 : index
    %c0_6 = arith.constant 0 : index
    %23 = vector.load %arg1[%c0_5, %c0_6] : memref<8x512xf32, #tpu.memory_space<vmem>>, vector<8x512xf32>
    %c0_7 = arith.constant 0 : index
    %c128 = arith.constant 128 : index
    %24 = vector.load %arg7[%c0_7, %c128] : memref<8x768xf32, #tpu.memory_space<vmem>>, vector<8x512xf32>
    tpu.vector_store %arg7[%c0_7, %c128], %23 {strides = array<i32>} : memref<8x768xf32, #tpu.memory_space<vmem>>, vector<8x512xf32>,
    %c0_8 = arith.constant 0 : index
    %c127 = arith.constant 127 : index
    %25 = vector.load %arg7[%c0_8, %c127] : memref<8x768xf32, #tpu.memory_space<vmem>>, vector<8x512xf32>
    %cst_9 = arith.constant 0.000000e+00 : f32
    %26 = vector.broadcast %cst_9 : f32 to vector<8x512xf32>
    %27 = arith.select %18, %26, %25 : vector<8x512xi1>, vector<8x512xf32>
    %c0_10 = arith.constant 0 : index
    %c129 = arith.constant 129 : index
    %28 = vector.load %arg7[%c0_10, %c129] : memref<8x768xf32, #tpu.memory_space<vmem>>, vector<8x512xf32>
    %cst_11 = arith.constant 0.000000e+00 : f32
    %29 = vector.broadcast %cst_11 : f32 to vector<8x512xf32>
    %30 = arith.select %20, %29, %28 : vector<8x512xi1>, vector<8x512xf32>
    %c0_12 = arith.constant 0 : index
    %c0_13 = arith.constant 0 : index
    %31 = vector.load %arg8[%c0_12, %c0_13] : memref<24x512xf32, #tpu.memory_space<vmem>>, vector<8x512xf32>
    tpu.vector_store %arg8[%c0_12, %c0_13], %27 {strides = array<i32>} : memref<24x512xf32, #tpu.memory_space<vmem>>, vector<8x512xf32>,
    %c8 = arith.constant 8 : index
    %c0_14 = arith.constant 0 : index
    %32 = vector.load %arg8[%c8, %c0_14] : memref<24x512xf32, #tpu.memory_space<vmem>>, vector<8x512xf32>
    tpu.vector_store %arg8[%c8, %c0_14], %23 {strides = array<i32>} : memref<24x512xf32, #tpu.memory_space<vmem>>, vector<8x512xf32>,
    %c16 = arith.constant 16 : index
    %c0_15 = arith.constant 0 : index
    %33 = vector.load %arg8[%c16, %c0_15] : memref<24x512xf32, #tpu.memory_space<vmem>>, vector<8x512xf32>
    tpu.vector_store %arg8[%c16, %c0_15], %30 {strides = array<i32>} : memref<24x512xf32, #tpu.memory_space<vmem>>, vector<8x512xf32>,
    %c0_16 = arith.constant 0 : index
    %c0_17 = arith.constant 0 : index
    %34 = vector.load %arg8[%c0_16, %c0_17] : memref<24x512xf32, #tpu.memory_space<vmem>>, vector<24x512xf32>
    %35 = arith.truncf %34 : vector<24x512xf32> to vector<24x512xbf16>
    %c0_18 = arith.constant 0 : index
    %c0_19 = arith.constant 0 : index
    %c0_20 = arith.constant 0 : index
    %36 = vector.load %arg2[%c0_18, %c0_19, %c0_20] : memref<5x8x24xbf16, #tpu.memory_space<vmem>>, vector<1x8x24xbf16>
    %37 = vector.shape_cast %36 : vector<1x8x24xbf16> to vector<8x24xbf16>
    %cst_21 = arith.constant dense<0.000000e+00> : vector<8x512xf32>
    %38 = tpu.matmul %37, %35, %cst_21 {dimension_numbers = #tpu.dot_dimension_numbers<[1], [0], [0], [1], [0, 0, 1, 1], [], []>} : vector<8x24xbf16>, vector<24x512xbf16>, vector<8x512xf32> -> vector<8x512xf32>
    %c0_22 = arith.constant 0 : index
    %c0_23 = arith.constant 0 : index
    %c0_24 = arith.constant 0 : index
    %39 = vector.load %arg3[%c0_22, %c0_23, %c0_24] : memref<5x8x1xf32, #tpu.memory_space<vmem>>, vector<1x8x1xf32>
    %40 = vector.shape_cast %39 : vector<1x8x1xf32> to vector<8x1xf32>
    %41 = vector.broadcast %40 : vector<8x1xf32> to vector<8x512xf32>
    %42 = arith.addf %38, %41 : vector<8x512xf32>
    %cst_25 = arith.constant 0.000000e+00 : f32
    %43 = vector.broadcast %cst_25 : f32 to vector<8x512xf32>
    %44 = arith.maximumf %42, %43 : vector<8x512xf32>
    %c0_26 = arith.constant 0 : index
    %c128_27 = arith.constant 128 : index
    %45 = vector.load %arg7[%c0_26, %c128_27] : memref<8x768xf32, #tpu.memory_space<vmem>>, vector<8x512xf32>
    tpu.vector_store %arg7[%c0_26, %c128_27], %44 {strides = array<i32>} : memref<8x768xf32, #tpu.memory_space<vmem>>, vector<8x512xf32>,
    %c0_28 = arith.constant 0 : index
    %c127_29 = arith.constant 127 : index
    %46 = vector.load %arg7[%c0_28, %c127_29] : memref<8x768xf32, #tpu.memory_space<vmem>>, vector<8x512xf32>
    %cst_30 = arith.constant 0.000000e+00 : f32
    %47 = vector.broadcast %cst_30 : f32 to vector<8x512xf32>
    %48 = arith.select %18, %47, %46 : vector<8x512xi1>, vector<8x512xf32>
    %c0_31 = arith.constant 0 : index
    %c129_32 = arith.constant 129 : index
    %49 = vector.load %arg7[%c0_31, %c129_32] : memref<8x768xf32, #tpu.memory_space<vmem>>, vector<8x512xf32>
    %cst_33 = arith.constant 0.000000e+00 : f32
    %50 = vector.broadcast %cst_33 : f32 to vector<8x512xf32>
    %51 = arith.select %20, %50, %49 : vector<8x512xi1>, vector<8x512xf32>
    %c0_34 = arith.constant 0 : index
    %c0_35 = arith.constant 0 : index
    %52 = vector.load %arg8[%c0_34, %c0_35] : memref<24x512xf32, #tpu.memory_space<vmem>>, vector<8x512xf32>
    tpu.vector_store %arg8[%c0_34, %c0_35], %48 {strides = array<i32>} : memref<24x512xf32, #tpu.memory_space<vmem>>, vector<8x512xf32>,
    %c8_36 = arith.constant 8 : index
    %c0_37 = arith.constant 0 : index
    %53 = vector.load %arg8[%c8_36, %c0_37] : memref<24x512xf32, #tpu.memory_space<vmem>>, vector<8x512xf32>
    tpu.vector_store %arg8[%c8_36, %c0_37], %44 {strides = array<i32>} : memref<24x512xf32, #tpu.memory_space<vmem>>, vector<8x512xf32>,
    %c16_38 = arith.constant 16 : index
    %c0_39 = arith.constant 0 : index
    %54 = vector.load %arg8[%c16_38, %c0_39] : memref<24x512xf32, #tpu.memory_space<vmem>>, vector<8x512xf32>
    tpu.vector_store %arg8[%c16_38, %c0_39], %51 {strides = array<i32>} : memref<24x512xf32, #tpu.memory_space<vmem>>, vector<8x512xf32>,
    %c0_40 = arith.constant 0 : index
    %c0_41 = arith.constant 0 : index
    %55 = vector.load %arg8[%c0_40, %c0_41] : memref<24x512xf32, #tpu.memory_space<vmem>>, vector<24x512xf32>
    %56 = arith.truncf %55 : vector<24x512xf32> to vector<24x512xbf16>
    %c1 = arith.constant 1 : index
    %c0_42 = arith.constant 0 : index
    %c0_43 = arith.constant 0 : index
    %57 = vector.load %arg2[%c1, %c0_42, %c0_43] : memref<5x8x24xbf16, #tpu.memory_space<vmem>>, vector<1x8x24xbf16>
    %58 = vector.shape_cast %57 : vector<1x8x24xbf16> to vector<8x24xbf16>
    %cst_44 = arith.constant dense<0.000000e+00> : vector<8x512xf32>
    %59 = tpu.matmul %58, %56, %cst_44 {dimension_numbers = #tpu.dot_dimension_numbers<[1], [0], [0], [1], [0, 0, 1, 1], [], []>} : vector<8x24xbf16>, vector<24x512xbf16>, vector<8x512xf32> -> vector<8x512xf32>
    %c1_45 = arith.constant 1 : index
    %c0_46 = arith.constant 0 : index
    %c0_47 = arith.constant 0 : index
    %60 = vector.load %arg3[%c1_45, %c0_46, %c0_47] : memref<5x8x1xf32, #tpu.memory_space<vmem>>, vector<1x8x1xf32>
    %61 = vector.shape_cast %60 : vector<1x8x1xf32> to vector<8x1xf32>
    %62 = vector.broadcast %61 : vector<8x1xf32> to vector<8x512xf32>
    %63 = arith.addf %59, %62 : vector<8x512xf32>
    %cst_48 = arith.constant 0.000000e+00 : f32
    %64 = vector.broadcast %cst_48 : f32 to vector<8x512xf32>
    %65 = arith.maximumf %63, %64 : vector<8x512xf32>
    %c0_49 = arith.constant 0 : index
    %c128_50 = arith.constant 128 : index
    %66 = vector.load %arg7[%c0_49, %c128_50] : memref<8x768xf32, #tpu.memory_space<vmem>>, vector<8x512xf32>
    tpu.vector_store %arg7[%c0_49, %c128_50], %65 {strides = array<i32>} : memref<8x768xf32, #tpu.memory_space<vmem>>, vector<8x512xf32>,
    %c0_51 = arith.constant 0 : index
    %c127_52 = arith.constant 127 : index
    %67 = vector.load %arg7[%c0_51, %c127_52] : memref<8x768xf32, #tpu.memory_space<vmem>>, vector<8x512xf32>
    %cst_53 = arith.constant 0.000000e+00 : f32
    %68 = vector.broadcast %cst_53 : f32 to vector<8x512xf32>
    %69 = arith.select %18, %68, %67 : vector<8x512xi1>, vector<8x512xf32>
    %c0_54 = arith.constant 0 : index
    %c129_55 = arith.constant 129 : index
    %70 = vector.load %arg7[%c0_54, %c129_55] : memref<8x768xf32, #tpu.memory_space<vmem>>, vector<8x512xf32>
    %cst_56 = arith.constant 0.000000e+00 : f32
    %71 = vector.broadcast %cst_56 : f32 to vector<8x512xf32>
    %72 = arith.select %20, %71, %70 : vector<8x512xi1>, vector<8x512xf32>
    %c0_57 = arith.constant 0 : index
    %c0_58 = arith.constant 0 : index
    %73 = vector.load %arg8[%c0_57, %c0_58] : memref<24x512xf32, #tpu.memory_space<vmem>>, vector<8x512xf32>
    tpu.vector_store %arg8[%c0_57, %c0_58], %69 {strides = array<i32>} : memref<24x512xf32, #tpu.memory_space<vmem>>, vector<8x512xf32>,
    %c8_59 = arith.constant 8 : index
    %c0_60 = arith.constant 0 : index
    %74 = vector.load %arg8[%c8_59, %c0_60] : memref<24x512xf32, #tpu.memory_space<vmem>>, vector<8x512xf32>
    tpu.vector_store %arg8[%c8_59, %c0_60], %65 {strides = array<i32>} : memref<24x512xf32, #tpu.memory_space<vmem>>, vector<8x512xf32>,
    %c16_61 = arith.constant 16 : index
    %c0_62 = arith.constant 0 : index
    %75 = vector.load %arg8[%c16_61, %c0_62] : memref<24x512xf32, #tpu.memory_space<vmem>>, vector<8x512xf32>
    tpu.vector_store %arg8[%c16_61, %c0_62], %72 {strides = array<i32>} : memref<24x512xf32, #tpu.memory_space<vmem>>, vector<8x512xf32>,
    %c0_63 = arith.constant 0 : index
    %c0_64 = arith.constant 0 : index
    %76 = vector.load %arg8[%c0_63, %c0_64] : memref<24x512xf32, #tpu.memory_space<vmem>>, vector<24x512xf32>
    %77 = arith.truncf %76 : vector<24x512xf32> to vector<24x512xbf16>
    %c2 = arith.constant 2 : index
    %c0_65 = arith.constant 0 : index
    %c0_66 = arith.constant 0 : index
    %78 = vector.load %arg2[%c2, %c0_65, %c0_66] : memref<5x8x24xbf16, #tpu.memory_space<vmem>>, vector<1x8x24xbf16>
    %79 = vector.shape_cast %78 : vector<1x8x24xbf16> to vector<8x24xbf16>
    %cst_67 = arith.constant dense<0.000000e+00> : vector<8x512xf32>
    %80 = tpu.matmul %79, %77, %cst_67 {dimension_numbers = #tpu.dot_dimension_numbers<[1], [0], [0], [1], [0, 0, 1, 1], [], []>} : vector<8x24xbf16>, vector<24x512xbf16>, vector<8x512xf32> -> vector<8x512xf32>
    %c2_68 = arith.constant 2 : index
    %c0_69 = arith.constant 0 : index
    %c0_70 = arith.constant 0 : index
    %81 = vector.load %arg3[%c2_68, %c0_69, %c0_70] : memref<5x8x1xf32, #tpu.memory_space<vmem>>, vector<1x8x1xf32>
    %82 = vector.shape_cast %81 : vector<1x8x1xf32> to vector<8x1xf32>
    %83 = vector.broadcast %82 : vector<8x1xf32> to vector<8x512xf32>
    %84 = arith.addf %80, %83 : vector<8x512xf32>
    %cst_71 = arith.constant 0.000000e+00 : f32
    %85 = vector.broadcast %cst_71 : f32 to vector<8x512xf32>
    %86 = arith.maximumf %84, %85 : vector<8x512xf32>
    %c0_72 = arith.constant 0 : index
    %c128_73 = arith.constant 128 : index
    %87 = vector.load %arg7[%c0_72, %c128_73] : memref<8x768xf32, #tpu.memory_space<vmem>>, vector<8x512xf32>
    tpu.vector_store %arg7[%c0_72, %c128_73], %86 {strides = array<i32>} : memref<8x768xf32, #tpu.memory_space<vmem>>, vector<8x512xf32>,
    %c0_74 = arith.constant 0 : index
    %c127_75 = arith.constant 127 : index
    %88 = vector.load %arg7[%c0_74, %c127_75] : memref<8x768xf32, #tpu.memory_space<vmem>>, vector<8x512xf32>
    %cst_76 = arith.constant 0.000000e+00 : f32
    %89 = vector.broadcast %cst_76 : f32 to vector<8x512xf32>
    %90 = arith.select %18, %89, %88 : vector<8x512xi1>, vector<8x512xf32>
    %c0_77 = arith.constant 0 : index
    %c129_78 = arith.constant 129 : index
    %91 = vector.load %arg7[%c0_77, %c129_78] : memref<8x768xf32, #tpu.memory_space<vmem>>, vector<8x512xf32>
    %cst_79 = arith.constant 0.000000e+00 : f32
    %92 = vector.broadcast %cst_79 : f32 to vector<8x512xf32>
    %93 = arith.select %20, %92, %91 : vector<8x512xi1>, vector<8x512xf32>
    %c0_80 = arith.constant 0 : index
    %c0_81 = arith.constant 0 : index
    %94 = vector.load %arg8[%c0_80, %c0_81] : memref<24x512xf32, #tpu.memory_space<vmem>>, vector<8x512xf32>
    tpu.vector_store %arg8[%c0_80, %c0_81], %90 {strides = array<i32>} : memref<24x512xf32, #tpu.memory_space<vmem>>, vector<8x512xf32>,
    %c8_82 = arith.constant 8 : index
    %c0_83 = arith.constant 0 : index
    %95 = vector.load %arg8[%c8_82, %c0_83] : memref<24x512xf32, #tpu.memory_space<vmem>>, vector<8x512xf32>
    tpu.vector_store %arg8[%c8_82, %c0_83], %86 {strides = array<i32>} : memref<24x512xf32, #tpu.memory_space<vmem>>, vector<8x512xf32>,
    %c16_84 = arith.constant 16 : index
    %c0_85 = arith.constant 0 : index
    %96 = vector.load %arg8[%c16_84, %c0_85] : memref<24x512xf32, #tpu.memory_space<vmem>>, vector<8x512xf32>
    tpu.vector_store %arg8[%c16_84, %c0_85], %93 {strides = array<i32>} : memref<24x512xf32, #tpu.memory_space<vmem>>, vector<8x512xf32>,
    %c0_86 = arith.constant 0 : index
    %c0_87 = arith.constant 0 : index
    %97 = vector.load %arg8[%c0_86, %c0_87] : memref<24x512xf32, #tpu.memory_space<vmem>>, vector<24x512xf32>
    %98 = arith.truncf %97 : vector<24x512xf32> to vector<24x512xbf16>
    %c3 = arith.constant 3 : index
    %c0_88 = arith.constant 0 : index
    %c0_89 = arith.constant 0 : index
    %99 = vector.load %arg2[%c3, %c0_88, %c0_89] : memref<5x8x24xbf16, #tpu.memory_space<vmem>>, vector<1x8x24xbf16>
    %100 = vector.shape_cast %99 : vector<1x8x24xbf16> to vector<8x24xbf16>
    %cst_90 = arith.constant dense<0.000000e+00> : vector<8x512xf32>
    %101 = tpu.matmul %100, %98, %cst_90 {dimension_numbers = #tpu.dot_dimension_numbers<[1], [0], [0], [1], [0, 0, 1, 1], [], []>} : vector<8x24xbf16>, vector<24x512xbf16>, vector<8x512xf32> -> vector<8x512xf32>
    %c3_91 = arith.constant 3 : index
    %c0_92 = arith.constant 0 : index
    %c0_93 = arith.constant 0 : index
    %102 = vector.load %arg3[%c3_91, %c0_92, %c0_93] : memref<5x8x1xf32, #tpu.memory_space<vmem>>, vector<1x8x1xf32>
    %103 = vector.shape_cast %102 : vector<1x8x1xf32> to vector<8x1xf32>
    %104 = vector.broadcast %103 : vector<8x1xf32> to vector<8x512xf32>
    %105 = arith.addf %101, %104 : vector<8x512xf32>
    %cst_94 = arith.constant 0.000000e+00 : f32
    %106 = vector.broadcast %cst_94 : f32 to vector<8x512xf32>
    %107 = arith.maximumf %105, %106 : vector<8x512xf32>
    %c0_95 = arith.constant 0 : index
    %c128_96 = arith.constant 128 : index
    %108 = vector.load %arg7[%c0_95, %c128_96] : memref<8x768xf32, #tpu.memory_space<vmem>>, vector<8x512xf32>
    tpu.vector_store %arg7[%c0_95, %c128_96], %107 {strides = array<i32>} : memref<8x768xf32, #tpu.memory_space<vmem>>, vector<8x512xf32>,
    %c0_97 = arith.constant 0 : index
    %c127_98 = arith.constant 127 : index
    %109 = vector.load %arg7[%c0_97, %c127_98] : memref<8x768xf32, #tpu.memory_space<vmem>>, vector<8x512xf32>
    %cst_99 = arith.constant 0.000000e+00 : f32
    %110 = vector.broadcast %cst_99 : f32 to vector<8x512xf32>
    %111 = arith.select %18, %110, %109 : vector<8x512xi1>, vector<8x512xf32>
    %c0_100 = arith.constant 0 : index
    %c129_101 = arith.constant 129 : index
    %112 = vector.load %arg7[%c0_100, %c129_101] : memref<8x768xf32, #tpu.memory_space<vmem>>, vector<8x512xf32>
    %cst_102 = arith.constant 0.000000e+00 : f32
    %113 = vector.broadcast %cst_102 : f32 to vector<8x512xf32>
    %114 = arith.select %20, %113, %112 : vector<8x512xi1>, vector<8x512xf32>
    %c0_103 = arith.constant 0 : index
    %c0_104 = arith.constant 0 : index
    %115 = vector.load %arg8[%c0_103, %c0_104] : memref<24x512xf32, #tpu.memory_space<vmem>>, vector<8x512xf32>
    tpu.vector_store %arg8[%c0_103, %c0_104], %111 {strides = array<i32>} : memref<24x512xf32, #tpu.memory_space<vmem>>, vector<8x512xf32>,
    %c8_105 = arith.constant 8 : index
    %c0_106 = arith.constant 0 : index
    %116 = vector.load %arg8[%c8_105, %c0_106] : memref<24x512xf32, #tpu.memory_space<vmem>>, vector<8x512xf32>
    tpu.vector_store %arg8[%c8_105, %c0_106], %107 {strides = array<i32>} : memref<24x512xf32, #tpu.memory_space<vmem>>, vector<8x512xf32>,
    %c16_107 = arith.constant 16 : index
    %c0_108 = arith.constant 0 : index
    %117 = vector.load %arg8[%c16_107, %c0_108] : memref<24x512xf32, #tpu.memory_space<vmem>>, vector<8x512xf32>
    tpu.vector_store %arg8[%c16_107, %c0_108], %114 {strides = array<i32>} : memref<24x512xf32, #tpu.memory_space<vmem>>, vector<8x512xf32>,
    %c0_109 = arith.constant 0 : index
    %c0_110 = arith.constant 0 : index
    %118 = vector.load %arg8[%c0_109, %c0_110] : memref<24x512xf32, #tpu.memory_space<vmem>>, vector<24x512xf32>
    %119 = arith.truncf %118 : vector<24x512xf32> to vector<24x512xbf16>
    %c4 = arith.constant 4 : index
    %c0_111 = arith.constant 0 : index
    %c0_112 = arith.constant 0 : index
    %120 = vector.load %arg2[%c4, %c0_111, %c0_112] : memref<5x8x24xbf16, #tpu.memory_space<vmem>>, vector<1x8x24xbf16>
    %121 = vector.shape_cast %120 : vector<1x8x24xbf16> to vector<8x24xbf16>
    %cst_113 = arith.constant dense<0.000000e+00> : vector<8x512xf32>
    %122 = tpu.matmul %121, %119, %cst_113 {dimension_numbers = #tpu.dot_dimension_numbers<[1], [0], [0], [1], [0, 0, 1, 1], [], []>} : vector<8x24xbf16>, vector<24x512xbf16>, vector<8x512xf32> -> vector<8x512xf32>
    %c4_114 = arith.constant 4 : index
    %c0_115 = arith.constant 0 : index
    %c0_116 = arith.constant 0 : index
    %123 = vector.load %arg3[%c4_114, %c0_115, %c0_116] : memref<5x8x1xf32, #tpu.memory_space<vmem>>, vector<1x8x1xf32>
    %124 = vector.shape_cast %123 : vector<1x8x1xf32> to vector<8x1xf32>
    %125 = vector.broadcast %124 : vector<8x1xf32> to vector<8x512xf32>
    %126 = arith.addf %122, %125 : vector<8x512xf32>
    %cst_117 = arith.constant 0.000000e+00 : f32
    %127 = vector.broadcast %cst_117 : f32 to vector<8x512xf32>
    %128 = arith.maximumf %126, %127 : vector<8x512xf32>
    %129 = vector.shape_cast %128 : vector<8x512xf32> to vector<8x2x256xf32>
    %130 = arith.truncf %129 : vector<8x2x256xf32> to vector<8x2x256xbf16>
    %c0_118 = arith.constant 0 : index
    %c0_119 = arith.constant 0 : index
    %c0_120 = arith.constant 0 : index
    %131 = vector.load %arg4[%c0_118, %c0_119, %c0_120] : memref<8x20x256xbf16, #tpu.memory_space<vmem>>, vector<8x20x256xbf16>
    "tpu.trace_start"() <{level = 10 : i32, message = "hnl,hdl->hnd"}> : () -> ()
    %cst_121 = arith.constant dense<0.000000e+00> : vector<8x2x20xf32>
    %132 = tpu.matmul %130, %131, %cst_121 {dimension_numbers = #tpu.dot_dimension_numbers<[2], [2], [1], [1], [0, 0, 0, 1, 1, 1], [0], [0]>} : vector<8x2x256xbf16>, vector<8x20x256xbf16>, vector<8x2x20xf32> -> vector<8x2x20xf32>
    "tpu.trace_stop"() : () -> ()
    %cst_122 = arith.constant dense<0.000000e+00> : vector<2x20xf32>
    %133 = vector.multi_reduction <add>, %132, %cst_122 [0] : vector<8x2x20xf32> to vector<2x20xf32>
    %c0_123 = arith.constant 0 : index
    %c0_124 = arith.constant 0 : index
    %134 = vector.load %arg5[%c0_123, %c0_124] : memref<3x20xf32, #tpu.memory_space<vmem>>, vector<1x20xf32>
    %135 = vector.broadcast %134 : vector<1x20xf32> to vector<2x20xf32>
    %136 = arith.addf %133, %135 : vector<2x20xf32>
    %cst_125 = arith.constant 0.000000e+00 : f32
    %137 = vector.broadcast %cst_125 : f32 to vector<2x20xf32>
    %138 = arith.maximumf %136, %137 : vector<2x20xf32>
    %c1_126 = arith.constant 1 : index
    %c0_127 = arith.constant 0 : index
    %139 = vector.load %arg5[%c1_126, %c0_127] : memref<3x20xf32, #tpu.memory_space<vmem>>, vector<1x20xf32>
    %140 = vector.broadcast %139 : vector<1x20xf32> to vector<2x20xf32>
    %141 = arith.mulf %138, %140 : vector<2x20xf32>
    %cst_128 = arith.constant dense<0.000000e+00> : vector<2xf32>
    %142 = vector.multi_reduction <add>, %141, %cst_128 [1] : vector<2x20xf32> to vector<2xf32>
    %143 = vector.shape_cast %142 : vector<2xf32> to vector<2x1xf32>
    %c2_129 = arith.constant 2 : index
    %c0_130 = arith.constant 0 : index
    %144 = vector.load %arg5[%c2_129, %c0_130] : memref<3x20xf32, #tpu.memory_space<vmem>>, vector<1x1xf32>
    %145 = vector.broadcast %144 : vector<1x1xf32> to vector<2x1xf32>
    %146 = arith.addf %143, %145 : vector<2x1xf32>
    %147 = vector.shape_cast %146 : vector<2x1xf32> to vector<1x2x1xf32>
    %c0_131 = arith.constant 0 : index
    %c0_132 = arith.constant 0 : index
    %c0_133 = arith.constant 0 : index
    %148 = vector.load %arg6[%c0_131, %c0_132, %c0_133] : memref<1x2x1xf32, #tpu.memory_space<vmem>>, vector<1x2x1xf32>
    tpu.vector_store %arg6[%c0_131, %c0_132, %c0_133], %147 {strides = array<i32>} : memref<1x2x1xf32, #tpu.memory_space<vmem>>, vector<1x2x1xf32>,
    return
  }
  func.func @transform_0(%arg0: i32) -> (i32, i32) {
    %c0_i32 = arith.constant 0 : i32
    %c0_i32_0 = arith.constant 0 : i32
    return %c0_i32, %arg0 : i32, i32
  }
  func.func @transform_1(%arg0: i32) -> (i32, i32, i32) {
    %c0_i32 = arith.constant 0 : i32
    %c0_i32_0 = arith.constant 0 : i32
    %c0_i32_1 = arith.constant 0 : i32
    %c0_i32_2 = arith.constant 0 : i32
    return %c0_i32, %c0_i32_0, %c0_i32_1 : i32, i32, i32
  }
  func.func @transform_2(%arg0: i32) -> (i32, i32, i32) {
    %c0_i32 = arith.constant 0 : i32
    %c0_i32_0 = arith.constant 0 : i32
    %c0_i32_1 = arith.constant 0 : i32
    %c0_i32_2 = arith.constant 0 : i32
    return %c0_i32, %c0_i32_0, %c0_i32_1 : i32, i32, i32
  }
  func.func @transform_3(%arg0: i32) -> (i32, i32, i32) {
    %c0_i32 = arith.constant 0 : i32
    %c0_i32_0 = arith.constant 0 : i32
    %c0_i32_1 = arith.constant 0 : i32
    %c0_i32_2 = arith.constant 0 : i32
    return %c0_i32, %c0_i32_0, %c0_i32_1 : i32, i32, i32
  }
  func.func @transform_4(%arg0: i32) -> (i32, i32) {
    %c0_i32 = arith.constant 0 : i32
    %c0_i32_0 = arith.constant 0 : i32
    %c0_i32_1 = arith.constant 0 : i32
    return %c0_i32, %c0_i32_0 : i32, i32
  }
  func.func @transform_5(%arg0: i32) -> (i32, i32, i32) {
    %c0_i32 = arith.constant 0 : i32
    %c0_i32_0 = arith.constant 0 : i32
    %c0_i32_1 = arith.constant 0 : i32
    return %arg0, %c0_i32, %c0_i32_0 : i32, i32, i32
  }
}

</mosaic_0001>

<llo_original>
// kernel: tpu_custom_call.1
$region0: #{tpu_custom_call.1}
  #allocation0 [shape = 'u32[]', space=smem, size = 0x4, offset = 0x4, fixed_abs, tag = 'smem constant byte address 0x4 - core index']
  #allocation1 [shape = 'u32[144,128]{1,0:T(1,128)}', space=vmem, size = 0x12000, scoped, tag = 'internal scratch']
  #allocation2 [shape = 'f32[8,768]{1,0:T(8,128)}', space=vmem, size = 0x6000, scoped, tag = 'scratch operand']
  #allocation3 [shape = 'f32[24,512]{1,0:T(8,128)}', space=vmem, size = 0xc000, scoped, tag = 'scratch operand']
  %s0 = inlined_call_operand.vmem [shape: f32[8,512], index: 0, kind: input, shape index: {}]
  %s1 = inlined_call_operand.vmem [shape: bf16[5,8,24], index: 1, kind: input, shape index: {}]
  %s2 = inlined_call_operand.vmem [shape: f32[5,8,1], index: 2, kind: input, shape index: {}]
  %s3 = inlined_call_operand.vmem [shape: bf16[8,20,256], index: 3, kind: input, shape index: {}]
  %s4 = inlined_call_operand.vmem [shape: f32[3,20], index: 4, kind: input, shape index: {}]
  %s5 = inlined_call_operand.vmem [shape: f32[1,2,1], index: 5, kind: output, shape index: {}]
  %s6 = sld [smem:[#allocation0]]
  $region30: #{tpu_custom_call.1} parent=0
    _
  %s8 = ssub.s32 1, %s6
  %s9 = scalar_select 0, %s8, %s6
  // Predicated region
  $region2: #{tpu_custom_call.1} parent=0 // pred_check
    _
  $region3: #{tpu_custom_call.1} parent=0 // pred_check_branch
    %11 = sbr.rel (0) target = $region5
  $region4: #{tpu_custom_call.1} parent=0 // pred_region
    _
  $region5: #{tpu_custom_call.1} parent=0 // pred_fallthru
    _
  // Predicated region
  $region6: #{tpu_custom_call.1} parent=0 // pred_check
    _
  $region7: #{tpu_custom_call.1} parent=0 // pred_check_branch
    %13 = sbr.rel (0) target = $region9
  $region8: #{tpu_custom_call.1} parent=0 // pred_region
    _
  $region9: #{tpu_custom_call.1} parent=0 // pred_fallthru
    _
  // Predicated region
  $region10: #{tpu_custom_call.1} parent=0 // pred_check
    _
  $region11: #{tpu_custom_call.1} parent=0 // pred_check_branch
    %15 = sbr.rel (0) target = $region13
  $region12: #{tpu_custom_call.1} parent=0 // pred_region
    _
  $region13: #{tpu_custom_call.1} parent=0 // pred_fallthru
    _
  // Predicated region
  $region14: #{tpu_custom_call.1} parent=0 // pred_check
    _
  $region15: #{tpu_custom_call.1} parent=0 // pred_check_branch
    %17 = sbr.rel (0) target = $region17
  $region16: #{tpu_custom_call.1} parent=0 // pred_region
    _
  $region17: #{tpu_custom_call.1} parent=0 // pred_fallthru
    _
  // Predicated region
  $region18: #{tpu_custom_call.1} parent=0 // pred_check
    _
  $region19: #{tpu_custom_call.1} parent=0 // pred_check_branch
    %19 = sbr.rel (0) target = $region21
  $region20: #{tpu_custom_call.1} parent=0 // pred_region
    _
  $region21: #{tpu_custom_call.1} parent=0 // pred_fallthru
    _
  %v21 = vlaneseq
  %v22 = vand.u32 %v21, 127
  %v23 = vadd.s32 %v22, 128
  %v24 = vadd.s32 %v22, 256
  %v25 = vadd.s32 %v22, 384
  %vm26 = vcmp.lt.s32.totalorder %v22, 0
  %v27 = vsub.s32 0, %v22
  %v28 = vsel %vm26, %v27, %v22
  %v29 = vshrl.u32 %v28, 8
  %v30 = vand.u32 %v28, 255
  %v31 = vsub.s32 0, %v30
  %v32 = vsel %vm26, %v31, %v30
  %vm33 = vcmp.lt.s32.totalorder %v23, 0
  %v34 = vsub.s32 0, %v23
  %v35 = vsel %vm33, %v34, %v23
  %v36 = vshrl.u32 %v35, 8
  %v37 = vand.u32 %v35, 255
  %v38 = vsub.s32 0, %v37
  %v39 = vsel %vm33, %v38, %v37
  %vm40 = vcmp.lt.s32.totalorder %v24, 0
  %v41 = vsub.s32 0, %v24
  %v42 = vsel %vm40, %v41, %v24
  %v43 = vshrl.u32 %v42, 8
  %v44 = vand.u32 %v42, 255
  %v45 = vsub.s32 0, %v44
  %v46 = vsel %vm40, %v45, %v44
  %vm47 = vcmp.lt.s32.totalorder %v25, 0
  %v48 = vsub.s32 0, %v25
  %v49 = vsel %vm47, %v48, %v25
  %v50 = vshrl.u32 %v49, 8
  %v51 = vand.u32 %v49, 255
  %v52 = vsub.s32 0, %v51
  %v53 = vsel %vm47, %v52, %v51
  %vm54 = vcmp.ne.s32.totalorder %v32, 0
  %vm55 = vcmp.ne.s32.totalorder %v39, 0
  %vm56 = vcmp.ne.s32.totalorder %v46, 0
  %vm57 = vcmp.ne.s32.totalorder %v53, 0
  %vm58 = vcmp.lt.s32.totalorder %v32, 0
  %vm59 = vcmp.lt.s32.totalorder %v39, 0
  %vm60 = vcmp.lt.s32.totalorder %v46, 0
  %vm61 = vcmp.lt.s32.totalorder %v53, 0
  %vm62 = vmand %vm58, %vm54
  %vm63 = vmand %vm59, %vm55
  %vm64 = vmand %vm60, %vm56
  %vm65 = vmand %vm61, %vm57
  %v66 = vadd.s32 %v32, 256
  %v67 = vadd.s32 %v39, 256
  %v68 = vadd.s32 %v46, 256
  %v69 = vadd.s32 %v53, 256
  %v70 = vsel %vm62, %v66, %v32
  %v71 = vsel %vm63, %v67, %v39
  %v72 = vsel %vm64, %v68, %v46
  %v73 = vsel %vm65, %v69, %v53
  %vm74 = vcmp.eq.s32.totalorder %v70, 0
  %vm75 = vcmp.eq.s32.totalorder %v71, 0
  %vm76 = vcmp.eq.s32.totalorder %v72, 0
  %vm77 = vcmp.eq.s32.totalorder %v73, 0
  %vm78 = vcmp.eq.s32.totalorder %v70, 255
  %vm79 = vcmp.eq.s32.totalorder %v71, 255
  %vm80 = vcmp.eq.s32.totalorder %v72, 255
  %vm81 = vcmp.eq.s32.totalorder %v73, 255
  %82 = vst [vmem:[#allocation2] sm:$0xff] 0.0
  %83 = vst [vmem:[#allocation2 + $0x8] sm:$0xff] 0.0
  %84 = vst [vmem:[#allocation2 + $0x10] sm:$0xff] 0.0
  %85 = vst [vmem:[#allocation2 + $0x18] sm:$0xff] 0.0
  %86 = vst [vmem:[#allocation2 + $0x20] sm:$0xff] 0.0
  %87 = vst [vmem:[#allocation2 + $0x28] sm:$0xff] 0.0
  %v88 = vld [vmem:[%s0] sm:$0xff]
  %v89 = vld [vmem:[%s0 + $0x8] sm:$0xff]
  %v90 = vld [vmem:[%s0 + $0x10] sm:$0xff]
  %v91 = vld [vmem:[%s0 + $0x18] sm:$0xff]
  %92 = vst [vmem:[#allocation2 + $0x8] sm:$0xff] %v88
  %93 = vst [vmem:[#allocation2 + $0x10] sm:$0xff] %v89
  %94 = vst [vmem:[#allocation2 + $0x18] sm:$0xff] %v90
  %95 = vst [vmem:[#allocation2 + $0x20] sm:$0xff] %v91
  %v96 = vld [vmem:[#allocation2] sm:$0xff]
  %v97 = vld [vmem:[#allocation2 + $0x8] sm:$0xff]
  %v98 = vld [vmem:[#allocation2 + $0x10] sm:$0xff]
  %v99 = vld [vmem:[#allocation2 + $0x18] sm:$0xff]
  %v100 = vld [vmem:[#allocation2 + $0x20] sm:$0xff]
  %106 = vrot.lane.b32.xlu0 %v96, 1
  %v107 = vpop.permute.xlu0 %106
  %108 = vrot.lane.b32.xlu0 %v97, 1
  %v109 = vpop.permute.xlu0 %108
  %110 = vrot.lane.b32.xlu0 %v98, 1
  %v111 = vpop.permute.xlu0 %110
  %112 = vrot.lane.b32.xlu0 %v99, 1
  %v113 = vpop.permute.xlu0 %112
  %114 = vrot.lane.b32.xlu0 %v100, 1
  %v115 = vpop.permute.xlu0 %114
  %vm116 = vcmask 7168
  %v117 = vsel %vm116, %v107, %v109
  %v118 = vsel %vm116, %v109, %v111
  %v119 = vsel %vm116, %v111, %v113
  %v120 = vsel %vm116, %v113, %v115
  %v125 = vsel %vm74, 0.0, %v117
  %v126 = vsel %vm75, 0.0, %v118
  %v127 = vsel %vm76, 0.0, %v119
  %v128 = vsel %vm77, 0.0, %v120
  %v129 = vld [vmem:[#allocation2 + $0x8] sm:$0xff]
  %v130 = vld [vmem:[#allocation2 + $0x10] sm:$0xff]
  %v131 = vld [vmem:[#allocation2 + $0x18] sm:$0xff]
  %v132 = vld [vmem:[#allocation2 + $0x20] sm:$0xff]
  %v133 = vld [vmem:[#allocation2 + $0x28] sm:$0xff]
  %139 = vrot.lane.b32.xlu0 %v129, 127
  %v140 = vpop.permute.xlu0 %139
  %141 = vrot.lane.b32.xlu0 %v130, 127
  %v142 = vpop.permute.xlu0 %141
  %143 = vrot.lane.b32.xlu0 %v131, 127
  %v144 = vpop.permute.xlu0 %143
  %145 = vrot.lane.b32.xlu0 %v132, 127
  %v146 = vpop.permute.xlu0 %145
  %147 = vrot.lane.b32.xlu0 %v133, 127
  %v148 = vpop.permute.xlu0 %147
  %vm149 = vcmask 1039360
  %v150 = vsel %vm149, %v140, %v142
  %v151 = vsel %vm149, %v142, %v144
  %v152 = vsel %vm149, %v144, %v146
  %v153 = vsel %vm149, %v146, %v148
  %v158 = vsel %vm78, 0.0, %v150
  %v159 = vsel %vm79, 0.0, %v151
  %v160 = vsel %vm80, 0.0, %v152
  %v161 = vsel %vm81, 0.0, %v153
  %162 = vst [vmem:[#allocation3] sm:$0xff] %v125
  %163 = vst [vmem:[#allocation3 + $0x8] sm:$0xff] %v126
  %164 = vst [vmem:[#allocation3 + $0x10] sm:$0xff] %v127
  %165 = vst [vmem:[#allocation3 + $0x18] sm:$0xff] %v128
  %166 = vst [vmem:[#allocation3 + $0x20] sm:$0xff] %v88
  %167 = vst [vmem:[#allocation3 + $0x28] sm:$0xff] %v89
  %168 = vst [vmem:[#allocation3 + $0x30] sm:$0xff] %v90
  %169 = vst [vmem:[#allocation3 + $0x38] sm:$0xff] %v91
  %170 = vst [vmem:[#allocation3 + $0x40] sm:$0xff] %v158
  %171 = vst [vmem:[#allocation3 + $0x48] sm:$0xff] %v159
  %172 = vst [vmem:[#allocation3 + $0x50] sm:$0xff] %v160
  %173 = vst [vmem:[#allocation3 + $0x58] sm:$0xff] %v161
  %v174 = vld [vmem:[#allocation3] sm:$0xff]
  %v175 = vld [vmem:[#allocation3 + $0x8] sm:$0xff]
  %v176 = vld [vmem:[#allocation3 + $0x10] sm:$0xff]
  %v177 = vld [vmem:[#allocation3 + $0x18] sm:$0xff]
  %v178 = vld [vmem:[#allocation3 + $0x20] sm:$0xff]
  %v179 = vld [vmem:[#allocation3 + $0x28] sm:$0xff]
  %v180 = vld [vmem:[#allocation3 + $0x30] sm:$0xff]
  %v181 = vld [vmem:[#allocation3 + $0x38] sm:$0xff]
  %v182 = vld [vmem:[#allocation3 + $0x40] sm:$0xff]
  %v183 = vld [vmem:[#allocation3 + $0x48] sm:$0xff]
  %v184 = vld [vmem:[#allocation3 + $0x50] sm:$0xff]
  %v185 = vld [vmem:[#allocation3 + $0x58] sm:$0xff]
  %v186 = vpack.c.bf16 %v178, %v174
  %v187 = vpack.c.bf16 %v179, %v175
  %v188 = vpack.c.bf16 %v180, %v176
  %v189 = vpack.c.bf16 %v181, %v177
  %v190 = vpack.c.bf16 %v182, %v182
  %v191 = vpack.c.bf16 %v183, %v183
  %v192 = vpack.c.bf16 %v184, %v184
  %v193 = vpack.c.bf16 %v185, %v185
  %v194 = vld [vmem:[%s1] sm:$0xf]
  %v195 = vld [vmem:[%s2] sm:$0xff]
  %197 = vset.pattern.permute.xlu0 0
  %198 = vperm.xlu0 %197, %v195
  %v199 = vpop.permute.xlu0 %198
  %vm201 = vcmask 195584
  %v203 = vsel %vm201, %v194, 0
  %vm205 = vcmask 1043456
  %v207 = vsel %vm205, %v190, 0
  %v210 = vsel %vm205, %v191, 0
  %v213 = vsel %vm205, %v192, 0
  %v216 = vsel %vm205, %v193, 0
  %218 = vmatprep.subr.bf16.mxu0 %v187
  %219 = vmatpush1.bf16.msra.mxu0 %v186
  %220 = vmatprep.subr.bf16.mxu0 %v210
  %221 = vmatpush1.bf16.msra.mxu0 %v207
  %222 = vmatprep.subr.bf16.mxu0 0
  %223 = vmatpush1.bf16.msra.mxu0 0
  %224 = vmatprep.subr.bf16.mxu0 0
  %225 = vmatpush1.bf16.msra.mxu0 0
  %226 = vmatprep.subr.bf16.mxu0 0
  %227 = vmatpush1.bf16.msra.mxu0 0
  %228 = vmatprep.subr.bf16.mxu0 0
  %229 = vmatpush1.bf16.msra.mxu0 0
  %230 = vmatprep.subr.bf16.mxu0 0
  %231 = vmatpush1.bf16.msra.mxu0 0
  %232 = vmatprep.subr.bf16.mxu0 0
  %233 = vmatpush1.bf16.msra.mxu0 0
  %234 = vmatprep.subr.bf16.mxu0 0
  %235 = vmatpush1.bf16.msra.mxu0 0
  %236 = vmatprep.subr.bf16.mxu0 0
  %237 = vmatpush1.bf16.msra.mxu0 0
  %238 = vmatprep.subr.bf16.mxu0 0
  %239 = vmatpush1.bf16.msra.mxu0 0
  %240 = vmatprep.subr.bf16.mxu0 0
  %241 = vmatpush1.bf16.msra.mxu0 0
  %242 = vmatprep.subr.bf16.mxu0 0
  %243 = vmatpush1.bf16.msra.mxu0 0
  %244 = vmatprep.subr.bf16.mxu0 0
  %245 = vmatpush1.bf16.msra.mxu0 0
  %246 = vmatprep.subr.bf16.mxu0 0
  %247 = vmatpush1.bf16.msra.mxu0 0
  %248 = vmatprep.subr.bf16.mxu0 0
  %249 = vmatpush1.bf16.msra.mxu0 0
  %250 = vmatprep.mubr.bf16.mxu0 0
  %251 = vmatmul.mubr.bf16.gmra.mrb[0].mxu0 %v203
  %v252 = vpop.f32.mrb[0].mxu0
  %v253 = vadd.f32 %v199, %v252
  %v254 = vpop.f32.mrb[0].mxu0
  %v255 = vadd.f32 %v199, %v254
  %v256 = vpop.f32.mrb[0].mxu0
  %v257 = vpop.f32.mrb[0].mxu0
  %258 = vdwg.mxu0
  %259 = vmatprep.subr.bf16.mxu0 %v189
  %260 = vmatpush1.bf16.msra.mxu0 %v188
  %261 = vmatprep.subr.bf16.mxu0 %v216
  %262 = vmatpush1.bf16.msra.mxu0 %v213
  %263 = vmatprep.subr.bf16.mxu0 0
  %264 = vmatpush1.bf16.msra.mxu0 0
  %265 = vmatprep.subr.bf16.mxu0 0
  %266 = vmatpush1.bf16.msra.mxu0 0
  %267 = vmatprep.subr.bf16.mxu0 0
  %268 = vmatpush1.bf16.msra.mxu0 0
  %269 = vmatprep.subr.bf16.mxu0 0
  %270 = vmatpush1.bf16.msra.mxu0 0
  %271 = vmatprep.subr.bf16.mxu0 0
  %272 = vmatpush1.bf16.msra.mxu0 0
  %273 = vmatprep.subr.bf16.mxu0 0
  %274 = vmatpush1.bf16.msra.mxu0 0
  %275 = vmatprep.subr.bf16.mxu0 0
  %276 = vmatpush1.bf16.msra.mxu0 0
  %277 = vmatprep.subr.bf16.mxu0 0
  %278 = vmatpush1.bf16.msra.mxu0 0
  %279 = vmatprep.subr.bf16.mxu0 0
  %280 = vmatpush1.bf16.msra.mxu0 0
  %281 = vmatprep.subr.bf16.mxu0 0
  %282 = vmatpush1.bf16.msra.mxu0 0
  %283 = vmatprep.subr.bf16.mxu0 0
  %284 = vmatpush1.bf16.msra.mxu0 0
  %285 = vmatprep.subr.bf16.mxu0 0
  %286 = vmatpush1.bf16.msra.mxu0 0
  %287 = vmatprep.subr.bf16.mxu0 0
  %288 = vmatpush1.bf16.msra.mxu0 0
  %289 = vmatprep.subr.bf16.mxu0 0
  %290 = vmatpush1.bf16.msra.mxu0 0
  %291 = vmatprep.mubr.bf16.mxu0 0
  %292 = vmatmul.mubr.bf16.gmra.mrb[0].mxu0 %v203
  %v293 = vpop.f32.mrb[0].mxu0
  %v294 = vadd.f32 %v199, %v293
  %v295 = vpop.f32.mrb[0].mxu0
  %v296 = vadd.f32 %v199, %v295
  %v297 = vpop.f32.mrb[0].mxu0
  %v298 = vpop.f32.mrb[0].mxu0
  %299 = vdwg.mxu0
  %v300 = vmax.f32 %v253, 0.0
  %v301 = vmax.f32 %v255, 0.0
  %v302 = vmax.f32 %v294, 0.0
  %v303 = vmax.f32 %v296, 0.0
  %304 = vst [vmem:[#allocation2 + $0x8] sm:$0xff] %v300
  %305 = vst [vmem:[#allocation2 + $0x10] sm:$0xff] %v301
  %306 = vst [vmem:[#allocation2 + $0x18] sm:$0xff] %v302
  %307 = vst [vmem:[#allocation2 + $0x20] sm:$0xff] %v303
  %v308 = vld [vmem:[#allocation2] sm:$0xff]
  %v309 = vld [vmem:[#allocation2 + $0x8] sm:$0xff]
  %v310 = vld [vmem:[#allocation2 + $0x10] sm:$0xff]
  %v311 = vld [vmem:[#allocation2 + $0x18] sm:$0xff]
  %v312 = vld [vmem:[#allocation2 + $0x20] sm:$0xff]
  %318 = vrot.lane.b32.xlu0 %v308, 1
  %v319 = vpop.permute.xlu0 %318
  %320 = vrot.lane.b32.xlu0 %v309, 1
  %v321 = vpop.permute.xlu0 %320
  %322 = vrot.lane.b32.xlu0 %v310, 1
  %v323 = vpop.permute.xlu0 %322
  %324 = vrot.lane.b32.xlu0 %v311, 1
  %v325 = vpop.permute.xlu0 %324
  %326 = vrot.lane.b32.xlu0 %v312, 1
  %v327 = vpop.permute.xlu0 %326
  %v328 = vsel %vm116, %v319, %v321
  %v329 = vsel %vm116, %v321, %v323
  %v330 = vsel %vm116, %v323, %v325
  %v331 = vsel %vm116, %v325, %v327
  %v336 = vsel %vm74, 0.0, %v328
  %v337 = vsel %vm75, 0.0, %v329
  %v338 = vsel %vm76, 0.0, %v330
  %v339 = vsel %vm77, 0.0, %v331
  %v340 = vld [vmem:[#allocation2 + $0x8] sm:$0xff]
  %v341 = vld [vmem:[#allocation2 + $0x10] sm:$0xff]
  %v342 = vld [vmem:[#allocation2 + $0x18] sm:$0xff]
  %v343 = vld [vmem:[#allocation2 + $0x20] sm:$0xff]
  %v344 = vld [vmem:[#allocation2 + $0x28] sm:$0xff]
  %350 = vrot.lane.b32.xlu0 %v340, 127
  %v351 = vpop.permute.xlu0 %350
  %352 = vrot.lane.b32.xlu0 %v341, 127
  %v353 = vpop.permute.xlu0 %352
  %354 = vrot.lane.b32.xlu0 %v342, 127
  %v355 = vpop.permute.xlu0 %354
  %356 = vrot.lane.b32.xlu0 %v343, 127
  %v357 = vpop.permute.xlu0 %356
  %358 = vrot.lane.b32.xlu0 %v344, 127
  %v359 = vpop.permute.xlu0 %358
  %v360 = vsel %vm149, %v351, %v353
  %v361 = vsel %vm149, %v353, %v355
  %v362 = vsel %vm149, %v355, %v357
  %v363 = vsel %vm149, %v357, %v359
  %v368 = vsel %vm78, 0.0, %v360
  %v369 = vsel %vm79, 0.0, %v361
  %v370 = vsel %vm80, 0.0, %v362
  %v371 = vsel %vm81, 0.0, %v363
  %372 = vst [vmem:[#allocation3] sm:$0xff] %v336
  %373 = vst [vmem:[#allocation3 + $0x8] sm:$0xff] %v337
  %374 = vst [vmem:[#allocation3 + $0x10] sm:$0xff] %v338
  %375 = vst [vmem:[#allocation3 + $0x18] sm:$0xff] %v339
  %376 = vst [vmem:[#allocation3 + $0x20] sm:$0xff] %v300
  %377 = vst [vmem:[#allocation3 + $0x28] sm:$0xff] %v301
  %378 = vst [vmem:[#allocation3 + $0x30] sm:$0xff] %v302
  %379 = vst [vmem:[#allocation3 + $0x38] sm:$0xff] %v303
  %380 = vst [vmem:[#allocation3 + $0x40] sm:$0xff] %v368
  %381 = vst [vmem:[#allocation3 + $0x48] sm:$0xff] %v369
  %382 = vst [vmem:[#allocation3 + $0x50] sm:$0xff] %v370
  %383 = vst [vmem:[#allocation3 + $0x58] sm:$0xff] %v371
  %v384 = vld [vmem:[#allocation3] sm:$0xff]
  %v385 = vld [vmem:[#allocation3 + $0x8] sm:$0xff]
  %v386 = vld [vmem:[#allocation3 + $0x10] sm:$0xff]
  %v387 = vld [vmem:[#allocation3 + $0x18] sm:$0xff]
  %v388 = vld [vmem:[#allocation3 + $0x20] sm:$0xff]
  %v389 = vld [vmem:[#allocation3 + $0x28] sm:$0xff]
  %v390 = vld [vmem:[#allocation3 + $0x30] sm:$0xff]
  %v391 = vld [vmem:[#allocation3 + $0x38] sm:$0xff]
  %v392 = vld [vmem:[#allocation3 + $0x40] sm:$0xff]
  %v393 = vld [vmem:[#allocation3 + $0x48] sm:$0xff]
  %v394 = vld [vmem:[#allocation3 + $0x50] sm:$0xff]
  %v395 = vld [vmem:[#allocation3 + $0x58] sm:$0xff]
  %v396 = vpack.c.bf16 %v388, %v384
  %v397 = vpack.c.bf16 %v389, %v385
  %v398 = vpack.c.bf16 %v390, %v386
  %v399 = vpack.c.bf16 %v391, %v387
  %v400 = vpack.c.bf16 %v392, %v392
  %v401 = vpack.c.bf16 %v393, %v393
  %v402 = vpack.c.bf16 %v394, %v394
  %v403 = vpack.c.bf16 %v395, %v395
  %s404 = scalar_lea.vmem %s1, 4
  %v405 = vld [vmem:[%s404] sm:$0xf]
  %s406 = scalar_lea.vmem %s2, 8
  %v407 = vld [vmem:[%s406] sm:$0xff]
  %409 = vset.pattern.permute.xlu0 0
  %410 = vperm.xlu0 %409, %v407
  %v411 = vpop.permute.xlu0 %410
  %v414 = vsel %vm201, %v405, 0
  %v417 = vsel %vm205, %v400, 0
  %v420 = vsel %vm205, %v401, 0
  %v423 = vsel %vm205, %v402, 0
  %v426 = vsel %vm205, %v403, 0
  %428 = vmatprep.subr.bf16.mxu0 %v397
  %429 = vmatpush1.bf16.msra.mxu0 %v396
  %430 = vmatprep.subr.bf16.mxu0 %v420
  %431 = vmatpush1.bf16.msra.mxu0 %v417
  %432 = vmatprep.subr.bf16.mxu0 0
  %433 = vmatpush1.bf16.msra.mxu0 0
  %434 = vmatprep.subr.bf16.mxu0 0
  %435 = vmatpush1.bf16.msra.mxu0 0
  %436 = vmatprep.subr.bf16.mxu0 0
  %437 = vmatpush1.bf16.msra.mxu0 0
  %438 = vmatprep.subr.bf16.mxu0 0
  %439 = vmatpush1.bf16.msra.mxu0 0
  %440 = vmatprep.subr.bf16.mxu0 0
  %441 = vmatpush1.bf16.msra.mxu0 0
  %442 = vmatprep.subr.bf16.mxu0 0
  %443 = vmatpush1.bf16.msra.mxu0 0
  %444 = vmatprep.subr.bf16.mxu0 0
  %445 = vmatpush1.bf16.msra.mxu0 0
  %446 = vmatprep.subr.bf16.mxu0 0
  %447 = vmatpush1.bf16.msra.mxu0 0
  %448 = vmatprep.subr.bf16.mxu0 0
  %449 = vmatpush1.bf16.msra.mxu0 0
  %450 = vmatprep.subr.bf16.mxu0 0
  %451 = vmatpush1.bf16.msra.mxu0 0
  %452 = vmatprep.subr.bf16.mxu0 0
  %453 = vmatpush1.bf16.msra.mxu0 0
  %454 = vmatprep.subr.bf16.mxu0 0
  %455 = vmatpush1.bf16.msra.mxu0 0
  %456 = vmatprep.subr.bf16.mxu0 0
  %457 = vmatpush1.bf16.msra.mxu0 0
  %458 = vmatprep.subr.bf16.mxu0 0
  %459 = vmatpush1.bf16.msra.mxu0 0
  %460 = vmatprep.mubr.bf16.mxu0 0
  %461 = vmatmul.mubr.bf16.gmra.mrb[0].mxu0 %v414
  %v462 = vpop.f32.mrb[0].mxu0
  %v463 = vadd.f32 %v411, %v462
  %v464 = vpop.f32.mrb[0].mxu0
  %v465 = vadd.f32 %v411, %v464
  %v466 = vpop.f32.mrb[0].mxu0
  %v467 = vpop.f32.mrb[0].mxu0
  %468 = vdwg.mxu0
  %469 = vmatprep.subr.bf16.mxu0 %v399
  %470 = vmatpush1.bf16.msra.mxu0 %v398
  %471 = vmatprep.subr.bf16.mxu0 %v426
  %472 = vmatpush1.bf16.msra.mxu0 %v423
  %473 = vmatprep.subr.bf16.mxu0 0
  %474 = vmatpush1.bf16.msra.mxu0 0
  %475 = vmatprep.subr.bf16.mxu0 0
  %476 = vmatpush1.bf16.msra.mxu0 0
  %477 = vmatprep.subr.bf16.mxu0 0
  %478 = vmatpush1.bf16.msra.mxu0 0
  %479 = vmatprep.subr.bf16.mxu0 0
  %480 = vmatpush1.bf16.msra.mxu0 0
  %481 = vmatprep.subr.bf16.mxu0 0
  %482 = vmatpush1.bf16.msra.mxu0 0
  %483 = vmatprep.subr.bf16.mxu0 0
  %484 = vmatpush1.bf16.msra.mxu0 0
  %485 = vmatprep.subr.bf16.mxu0 0
  %486 = vmatpush1.bf16.msra.mxu0 0
  %487 = vmatprep.subr.bf16.mxu0 0
  %488 = vmatpush1.bf16.msra.mxu0 0
  %489 = vmatprep.subr.bf16.mxu0 0
  %490 = vmatpush1.bf16.msra.mxu0 0
  %491 = vmatprep.subr.bf16.mxu0 0
  %492 = vmatpush1.bf16.msra.mxu0 0
  %493 = vmatprep.subr.bf16.mxu0 0
  %494 = vmatpush1.bf16.msra.mxu0 0
  %495 = vmatprep.subr.bf16.mxu0 0
  %496 = vmatpush1.bf16.msra.mxu0 0
  %497 = vmatprep.subr.bf16.mxu0 0
  %498 = vmatpush1.bf16.msra.mxu0 0
  %499 = vmatprep.subr.bf16.mxu0 0
  %500 = vmatpush1.bf16.msra.mxu0 0
  %501 = vmatprep.mubr.bf16.mxu0 0
  %502 = vmatmul.mubr.bf16.gmra.mrb[0].mxu0 %v414
  %v503 = vpop.f32.mrb[0].mxu0
  %v504 = vadd.f32 %v411, %v503
  %v505 = vpop.f32.mrb[0].mxu0
  %v506 = vadd.f32 %v411, %v505
  %v507 = vpop.f32.mrb[0].mxu0
  %v508 = vpop.f32.mrb[0].mxu0
  %509 = vdwg.mxu0
  %v510 = vmax.f32 %v463, 0.0
  %v511 = vmax.f32 %v465, 0.0
  %v512 = vmax.f32 %v504, 0.0
  %v513 = vmax.f32 %v506, 0.0
  %514 = vst [vmem:[#allocation2 + $0x8] sm:$0xff] %v510
  %515 = vst [vmem:[#allocation2 + $0x10] sm:$0xff] %v511
  %516 = vst [vmem:[#allocation2 + $0x18] sm:$0xff] %v512
  %517 = vst [vmem:[#allocation2 + $0x20] sm:$0xff] %v513
  %v518 = vld [vmem:[#allocation2] sm:$0xff]
  %v519 = vld [vmem:[#allocation2 + $0x8] sm:$0xff]
  %v520 = vld [vmem:[#allocation2 + $0x10] sm:$0xff]
  %v521 = vld [vmem:[#allocation2 + $0x18] sm:$0xff]
  %v522 = vld [vmem:[#allocation2 + $0x20] sm:$0xff]
  %528 = vrot.lane.b32.xlu0 %v518, 1
  %v529 = vpop.permute.xlu0 %528
  %530 = vrot.lane.b32.xlu0 %v519, 1
  %v531 = vpop.permute.xlu0 %530
  %532 = vrot.lane.b32.xlu0 %v520, 1
  %v533 = vpop.permute.xlu0 %532
  %534 = vrot.lane.b32.xlu0 %v521, 1
  %v535 = vpop.permute.xlu0 %534
  %536 = vrot.lane.b32.xlu0 %v522, 1
  %v537 = vpop.permute.xlu0 %536
  %v538 = vsel %vm116, %v529, %v531
  %v539 = vsel %vm116, %v531, %v533
  %v540 = vsel %vm116, %v533, %v535
  %v541 = vsel %vm116, %v535, %v537
  %v546 = vsel %vm74, 0.0, %v538
  %v547 = vsel %vm75, 0.0, %v539
  %v548 = vsel %vm76, 0.0, %v540
  %v549 = vsel %vm77, 0.0, %v541
  %v550 = vld [vmem:[#allocation2 + $0x8] sm:$0xff]
  %v551 = vld [vmem:[#allocation2 + $0x10] sm:$0xff]
  %v552 = vld [vmem:[#allocation2 + $0x18] sm:$0xff]
  %v553 = vld [vmem:[#allocation2 + $0x20] sm:$0xff]
  %v554 = vld [vmem:[#allocation2 + $0x28] sm:$0xff]
  %560 = vrot.lane.b32.xlu0 %v550, 127
  %v561 = vpop.permute.xlu0 %560
  %562 = vrot.lane.b32.xlu0 %v551, 127
  %v563 = vpop.permute.xlu0 %562
  %564 = vrot.lane.b32.xlu0 %v552, 127
  %v565 = vpop.permute.xlu0 %564
  %566 = vrot.lane.b32.xlu0 %v553, 127
  %v567 = vpop.permute.xlu0 %566
  %568 = vrot.lane.b32.xlu0 %v554, 127
  %v569 = vpop.permute.xlu0 %568
  %v570 = vsel %vm149, %v561, %v563
  %v571 = vsel %vm149, %v563, %v565
  %v572 = vsel %vm149, %v565, %v567
  %v573 = vsel %vm149, %v567, %v569
  %v578 = vsel %vm78, 0.0, %v570
  %v579 = vsel %vm79, 0.0, %v571
  %v580 = vsel %vm80, 0.0, %v572
  %v581 = vsel %vm81, 0.0, %v573
  %582 = vst [vmem:[#allocation3] sm:$0xff] %v546
  %583 = vst [vmem:[#allocation3 + $0x8] sm:$0xff] %v547
  %584 = vst [vmem:[#allocation3 + $0x10] sm:$0xff] %v548
  %585 = vst [vmem:[#allocation3 + $0x18] sm:$0xff] %v549
  %586 = vst [vmem:[#allocation3 + $0x20] sm:$0xff] %v510
  %587 = vst [vmem:[#allocation3 + $0x28] sm:$0xff] %v511
  %588 = vst [vmem:[#allocation3 + $0x30] sm:$0xff] %v512
  %589 = vst [vmem:[#allocation3 + $0x38] sm:$0xff] %v513
  %590 = vst [vmem:[#allocation3 + $0x40] sm:$0xff] %v578
  %591 = vst [vmem:[#allocation3 + $0x48] sm:$0xff] %v579
  %592 = vst [vmem:[#allocation3 + $0x50] sm:$0xff] %v580
  %593 = vst [vmem:[#allocation3 + $0x58] sm:$0xff] %v581
  %v594 = vld [vmem:[#allocation3] sm:$0xff]
  %v595 = vld [vmem:[#allocation3 + $0x8] sm:$0xff]
  %v596 = vld [vmem:[#allocation3 + $0x10] sm:$0xff]
  %v597 = vld [vmem:[#allocation3 + $0x18] sm:$0xff]
  %v598 = vld [vmem:[#allocation3 + $0x20] sm:$0xff]
  %v599 = vld [vmem:[#allocation3 + $0x28] sm:$0xff]
  %v600 = vld [vmem:[#allocation3 + $0x30] sm:$0xff]
  %v601 = vld [vmem:[#allocation3 + $0x38] sm:$0xff]
  %v602 = vld [vmem:[#allocation3 + $0x40] sm:$0xff]
  %v603 = vld [vmem:[#allocation3 + $0x48] sm:$0xff]
  %v604 = vld [vmem:[#allocation3 + $0x50] sm:$0xff]
  %v605 = vld [vmem:[#allocation3 + $0x58] sm:$0xff]
  %v606 = vpack.c.bf16 %v598, %v594
  %v607 = vpack.c.bf16 %v599, %v595
  %v608 = vpack.c.bf16 %v600, %v596
  %v609 = vpack.c.bf16 %v601, %v597
  %v610 = vpack.c.bf16 %v602, %v602
  %v611 = vpack.c.bf16 %v603, %v603
  %v612 = vpack.c.bf16 %v604, %v604
  %v613 = vpack.c.bf16 %v605, %v605
  %s614 = scalar_lea.vmem %s1, 8
  %v615 = vld [vmem:[%s614] sm:$0xf]
  %s616 = scalar_lea.vmem %s2, 16
  %v617 = vld [vmem:[%s616] sm:$0xff]
  %619 = vset.pattern.permute.xlu0 0
  %620 = vperm.xlu0 %619, %v617
  %v621 = vpop.permute.xlu0 %620
  %v624 = vsel %vm201, %v615, 0
  %v627 = vsel %vm205, %v610, 0
  %v630 = vsel %vm205, %v611, 0
  %v633 = vsel %vm205, %v612, 0
  %v636 = vsel %vm205, %v613, 0
  %638 = vmatprep.subr.bf16.mxu0 %v607
  %639 = vmatpush1.bf16.msra.mxu0 %v606
  %640 = vmatprep.subr.bf16.mxu0 %v630
  %641 = vmatpush1.bf16.msra.mxu0 %v627
  %642 = vmatprep.subr.bf16.mxu0 0
  %643 = vmatpush1.bf16.msra.mxu0 0
  %644 = vmatprep.subr.bf16.mxu0 0
  %645 = vmatpush1.bf16.msra.mxu0 0
  %646 = vmatprep.subr.bf16.mxu0 0
  %647 = vmatpush1.bf16.msra.mxu0 0
  %648 = vmatprep.subr.bf16.mxu0 0
  %649 = vmatpush1.bf16.msra.mxu0 0
  %650 = vmatprep.subr.bf16.mxu0 0
  %651 = vmatpush1.bf16.msra.mxu0 0
  %652 = vmatprep.subr.bf16.mxu0 0
  %653 = vmatpush1.bf16.msra.mxu0 0
  %654 = vmatprep.subr.bf16.mxu0 0
  %655 = vmatpush1.bf16.msra.mxu0 0
  %656 = vmatprep.subr.bf16.mxu0 0
  %657 = vmatpush1.bf16.msra.mxu0 0
  %658 = vmatprep.subr.bf16.mxu0 0
  %659 = vmatpush1.bf16.msra.mxu0 0
  %660 = vmatprep.subr.bf16.mxu0 0
  %661 = vmatpush1.bf16.msra.mxu0 0
  %662 = vmatprep.subr.bf16.mxu0 0
  %663 = vmatpush1.bf16.msra.mxu0 0
  %664 = vmatprep.subr.bf16.mxu0 0
  %665 = vmatpush1.bf16.msra.mxu0 0
  %666 = vmatprep.subr.bf16.mxu0 0
  %667 = vmatpush1.bf16.msra.mxu0 0
  %668 = vmatprep.subr.bf16.mxu0 0
  %669 = vmatpush1.bf16.msra.mxu0 0
  %670 = vmatprep.mubr.bf16.mxu0 0
  %671 = vmatmul.mubr.bf16.gmra.mrb[0].mxu0 %v624
  %v672 = vpop.f32.mrb[0].mxu0
  %v673 = vadd.f32 %v621, %v672
  %v674 = vpop.f32.mrb[0].mxu0
  %v675 = vadd.f32 %v621, %v674
  %v676 = vpop.f32.mrb[0].mxu0
  %v677 = vpop.f32.mrb[0].mxu0
  %678 = vdwg.mxu0
  %679 = vmatprep.subr.bf16.mxu0 %v609
  %680 = vmatpush1.bf16.msra.mxu0 %v608
  %681 = vmatprep.subr.bf16.mxu0 %v636
  %682 = vmatpush1.bf16.msra.mxu0 %v633
  %683 = vmatprep.subr.bf16.mxu0 0
  %684 = vmatpush1.bf16.msra.mxu0 0
  %685 = vmatprep.subr.bf16.mxu0 0
  %686 = vmatpush1.bf16.msra.mxu0 0
  %687 = vmatprep.subr.bf16.mxu0 0
  %688 = vmatpush1.bf16.msra.mxu0 0
  %689 = vmatprep.subr.bf16.mxu0 0
  %690 = vmatpush1.bf16.msra.mxu0 0
  %691 = vmatprep.subr.bf16.mxu0 0
  %692 = vmatpush1.bf16.msra.mxu0 0
  %693 = vmatprep.subr.bf16.mxu0 0
  %694 = vmatpush1.bf16.msra.mxu0 0
  %695 = vmatprep.subr.bf16.mxu0 0
  %696 = vmatpush1.bf16.msra.mxu0 0
  %697 = vmatprep.subr.bf16.mxu0 0
  %698 = vmatpush1.bf16.msra.mxu0 0
  %699 = vmatprep.subr.bf16.mxu0 0
  %700 = vmatpush1.bf16.msra.mxu0 0
  %701 = vmatprep.subr.bf16.mxu0 0
  %702 = vmatpush1.bf16.msra.mxu0 0
  %703 = vmatprep.subr.bf16.mxu0 0
  %704 = vmatpush1.bf16.msra.mxu0 0
  %705 = vmatprep.subr.bf16.mxu0 0
  %706 = vmatpush1.bf16.msra.mxu0 0
  %707 = vmatprep.subr.bf16.mxu0 0
  %708 = vmatpush1.bf16.msra.mxu0 0
  %709 = vmatprep.subr.bf16.mxu0 0
  %710 = vmatpush1.bf16.msra.mxu0 0
  %711 = vmatprep.mubr.bf16.mxu0 0
  %712 = vmatmul.mubr.bf16.gmra.mrb[0].mxu0 %v624
  %v713 = vpop.f32.mrb[0].mxu0
  %v714 = vadd.f32 %v621, %v713
  %v715 = vpop.f32.mrb[0].mxu0
  %v716 = vadd.f32 %v621, %v715
  %v717 = vpop.f32.mrb[0].mxu0
  %v718 = vpop.f32.mrb[0].mxu0
  %719 = vdwg.mxu0
  %v720 = vmax.f32 %v673, 0.0
  %v721 = vmax.f32 %v675, 0.0
  %v722 = vmax.f32 %v714, 0.0
  %v723 = vmax.f32 %v716, 0.0
  %724 = vst [vmem:[#allocation2 + $0x8] sm:$0xff] %v720
  %725 = vst [vmem:[#allocation2 + $0x10] sm:$0xff] %v721
  %726 = vst [vmem:[#allocation2 + $0x18] sm:$0xff] %v722
  %727 = vst [vmem:[#allocation2 + $0x20] sm:$0xff] %v723
  %v728 = vld [vmem:[#allocation2] sm:$0xff]
  %v729 = vld [vmem:[#allocation2 + $0x8] sm:$0xff]
  %v730 = vld [vmem:[#allocation2 + $0x10] sm:$0xff]
  %v731 = vld [vmem:[#allocation2 + $0x18] sm:$0xff]
  %v732 = vld [vmem:[#allocation2 + $0x20] sm:$0xff]
  %738 = vrot.lane.b32.xlu0 %v728, 1
  %v739 = vpop.permute.xlu0 %738
  %740 = vrot.lane.b32.xlu0 %v729, 1
  %v741 = vpop.permute.xlu0 %740
  %742 = vrot.lane.b32.xlu0 %v730, 1
  %v743 = vpop.permute.xlu0 %742
  %744 = vrot.lane.b32.xlu0 %v731, 1
  %v745 = vpop.permute.xlu0 %744
  %746 = vrot.lane.b32.xlu0 %v732, 1
  %v747 = vpop.permute.xlu0 %746
  %v748 = vsel %vm116, %v739, %v741
  %v749 = vsel %vm116, %v741, %v743
  %v750 = vsel %vm116, %v743, %v745
  %v751 = vsel %vm116, %v745, %v747
  %v756 = vsel %vm74, 0.0, %v748
  %v757 = vsel %vm75, 0.0, %v749
  %v758 = vsel %vm76, 0.0, %v750
  %v759 = vsel %vm77, 0.0, %v751
  %v760 = vld [vmem:[#allocation2 + $0x8] sm:$0xff]
  %v761 = vld [vmem:[#allocation2 + $0x10] sm:$0xff]
  %v762 = vld [vmem:[#allocation2 + $0x18] sm:$0xff]
  %v763 = vld [vmem:[#allocation2 + $0x20] sm:$0xff]
  %v764 = vld [vmem:[#allocation2 + $0x28] sm:$0xff]
  %770 = vrot.lane.b32.xlu0 %v760, 127
  %v771 = vpop.permute.xlu0 %770
  %772 = vrot.lane.b32.xlu0 %v761, 127
  %v773 = vpop.permute.xlu0 %772
  %774 = vrot.lane.b32.xlu0 %v762, 127
  %v775 = vpop.permute.xlu0 %774
  %776 = vrot.lane.b32.xlu0 %v763, 127
  %v777 = vpop.permute.xlu0 %776
  %778 = vrot.lane.b32.xlu0 %v764, 127
  %v779 = vpop.permute.xlu0 %778
  %v780 = vsel %vm149, %v771, %v773
  %v781 = vsel %vm149, %v773, %v775
  %v782 = vsel %vm149, %v775, %v777
  %v783 = vsel %vm149, %v777, %v779
  %v788 = vsel %vm78, 0.0, %v780
  %v789 = vsel %vm79, 0.0, %v781
  %v790 = vsel %vm80, 0.0, %v782
  %v791 = vsel %vm81, 0.0, %v783
  %792 = vst [vmem:[#allocation3] sm:$0xff] %v756
  %793 = vst [vmem:[#allocation3 + $0x8] sm:$0xff] %v757
  %794 = vst [vmem:[#allocation3 + $0x10] sm:$0xff] %v758
  %795 = vst [vmem:[#allocation3 + $0x18] sm:$0xff] %v759
  %796 = vst [vmem:[#allocation3 + $0x20] sm:$0xff] %v720
  %797 = vst [vmem:[#allocation3 + $0x28] sm:$0xff] %v721
  %798 = vst [vmem:[#allocation3 + $0x30] sm:$0xff] %v722
  %799 = vst [vmem:[#allocation3 + $0x38] sm:$0xff] %v723
  %800 = vst [vmem:[#allocation3 + $0x40] sm:$0xff] %v788
  %801 = vst [vmem:[#allocation3 + $0x48] sm:$0xff] %v789
  %802 = vst [vmem:[#allocation3 + $0x50] sm:$0xff] %v790
  %803 = vst [vmem:[#allocation3 + $0x58] sm:$0xff] %v791
  %v804 = vld [vmem:[#allocation3] sm:$0xff]
  %v805 = vld [vmem:[#allocation3 + $0x8] sm:$0xff]
  %v806 = vld [vmem:[#allocation3 + $0x10] sm:$0xff]
  %v807 = vld [vmem:[#allocation3 + $0x18] sm:$0xff]
  %v808 = vld [vmem:[#allocation3 + $0x20] sm:$0xff]
  %v809 = vld [vmem:[#allocation3 + $0x28] sm:$0xff]
  %v810 = vld [vmem:[#allocation3 + $0x30] sm:$0xff]
  %v811 = vld [vmem:[#allocation3 + $0x38] sm:$0xff]
  %v812 = vld [vmem:[#allocation3 + $0x40] sm:$0xff]
  %v813 = vld [vmem:[#allocation3 + $0x48] sm:$0xff]
  %v814 = vld [vmem:[#allocation3 + $0x50] sm:$0xff]
  %v815 = vld [vmem:[#allocation3 + $0x58] sm:$0xff]
  %v816 = vpack.c.bf16 %v808, %v804
  %v817 = vpack.c.bf16 %v809, %v805
  %v818 = vpack.c.bf16 %v810, %v806
  %v819 = vpack.c.bf16 %v811, %v807
  %v820 = vpack.c.bf16 %v812, %v812
  %v821 = vpack.c.bf16 %v813, %v813
  %v822 = vpack.c.bf16 %v814, %v814
  %v823 = vpack.c.bf16 %v815, %v815
  %s824 = scalar_lea.vmem %s1, 12
  %v825 = vld [vmem:[%s824] sm:$0xf]
  %s826 = scalar_lea.vmem %s2, 24
  %v827 = vld [vmem:[%s826] sm:$0xff]
  %829 = vset.pattern.permute.xlu0 0
  %830 = vperm.xlu0 %829, %v827
  %v831 = vpop.permute.xlu0 %830
  %v834 = vsel %vm201, %v825, 0
  %v837 = vsel %vm205, %v820, 0
  %v840 = vsel %vm205, %v821, 0
  %v843 = vsel %vm205, %v822, 0
  %v846 = vsel %vm205, %v823, 0
  %848 = vmatprep.subr.bf16.mxu0 %v817
  %849 = vmatpush1.bf16.msra.mxu0 %v816
  %850 = vmatprep.subr.bf16.mxu0 %v840
  %851 = vmatpush1.bf16.msra.mxu0 %v837
  %852 = vmatprep.subr.bf16.mxu0 0
  %853 = vmatpush1.bf16.msra.mxu0 0
  %854 = vmatprep.subr.bf16.mxu0 0
  %855 = vmatpush1.bf16.msra.mxu0 0
  %856 = vmatprep.subr.bf16.mxu0 0
  %857 = vmatpush1.bf16.msra.mxu0 0
  %858 = vmatprep.subr.bf16.mxu0 0
  %859 = vmatpush1.bf16.msra.mxu0 0
  %860 = vmatprep.subr.bf16.mxu0 0
  %861 = vmatpush1.bf16.msra.mxu0 0
  %862 = vmatprep.subr.bf16.mxu0 0
  %863 = vmatpush1.bf16.msra.mxu0 0
  %864 = vmatprep.subr.bf16.mxu0 0
  %865 = vmatpush1.bf16.msra.mxu0 0
  %866 = vmatprep.subr.bf16.mxu0 0
  %867 = vmatpush1.bf16.msra.mxu0 0
  %868 = vmatprep.subr.bf16.mxu0 0
  %869 = vmatpush1.bf16.msra.mxu0 0
  %870 = vmatprep.subr.bf16.mxu0 0
  %871 = vmatpush1.bf16.msra.mxu0 0
  %872 = vmatprep.subr.bf16.mxu0 0
  %873 = vmatpush1.bf16.msra.mxu0 0
  %874 = vmatprep.subr.bf16.mxu0 0
  %875 = vmatpush1.bf16.msra.mxu0 0
  %876 = vmatprep.subr.bf16.mxu0 0
  %877 = vmatpush1.bf16.msra.mxu0 0
  %878 = vmatprep.subr.bf16.mxu0 0
  %879 = vmatpush1.bf16.msra.mxu0 0
  %880 = vmatprep.mubr.bf16.mxu0 0
  %881 = vmatmul.mubr.bf16.gmra.mrb[0].mxu0 %v834
  %v882 = vpop.f32.mrb[0].mxu0
  %v883 = vadd.f32 %v831, %v882
  %v884 = vpop.f32.mrb[0].mxu0
  %v885 = vadd.f32 %v831, %v884
  %v886 = vpop.f32.mrb[0].mxu0
  %v887 = vpop.f32.mrb[0].mxu0
  %888 = vdwg.mxu0
  %889 = vmatprep.subr.bf16.mxu0 %v819
  %890 = vmatpush1.bf16.msra.mxu0 %v818
  %891 = vmatprep.subr.bf16.mxu0 %v846
  %892 = vmatpush1.bf16.msra.mxu0 %v843
  %893 = vmatprep.subr.bf16.mxu0 0
  %894 = vmatpush1.bf16.msra.mxu0 0
  %895 = vmatprep.subr.bf16.mxu0 0
  %896 = vmatpush1.bf16.msra.mxu0 0
  %897 = vmatprep.subr.bf16.mxu0 0
  %898 = vmatpush1.bf16.msra.mxu0 0
  %899 = vmatprep.subr.bf16.mxu0 0
  %900 = vmatpush1.bf16.msra.mxu0 0
  %901 = vmatprep.subr.bf16.mxu0 0
  %902 = vmatpush1.bf16.msra.mxu0 0
  %903 = vmatprep.subr.bf16.mxu0 0
  %904 = vmatpush1.bf16.msra.mxu0 0
  %905 = vmatprep.subr.bf16.mxu0 0
  %906 = vmatpush1.bf16.msra.mxu0 0
  %907 = vmatprep.subr.bf16.mxu0 0
  %908 = vmatpush1.bf16.msra.mxu0 0
  %909 = vmatprep.subr.bf16.mxu0 0
  %910 = vmatpush1.bf16.msra.mxu0 0
  %911 = vmatprep.subr.bf16.mxu0 0
  %912 = vmatpush1.bf16.msra.mxu0 0
  %913 = vmatprep.subr.bf16.mxu0 0
  %914 = vmatpush1.bf16.msra.mxu0 0
  %915 = vmatprep.subr.bf16.mxu0 0
  %916 = vmatpush1.bf16.msra.mxu0 0
  %917 = vmatprep.subr.bf16.mxu0 0
  %918 = vmatpush1.bf16.msra.mxu0 0
  %919 = vmatprep.subr.bf16.mxu0 0
  %920 = vmatpush1.bf16.msra.mxu0 0
  %921 = vmatprep.mubr.bf16.mxu0 0
  %922 = vmatmul.mubr.bf16.gmra.mrb[0].mxu0 %v834
  %v923 = vpop.f32.mrb[0].mxu0
  %v924 = vadd.f32 %v831, %v923
  %v925 = vpop.f32.mrb[0].mxu0
  %v926 = vadd.f32 %v831, %v925
  %v927 = vpop.f32.mrb[0].mxu0
  %v928 = vpop.f32.mrb[0].mxu0
  %929 = vdwg.mxu0
  %v930 = vmax.f32 %v883, 0.0
  %v931 = vmax.f32 %v885, 0.0
  %v932 = vmax.f32 %v924, 0.0
  %v933 = vmax.f32 %v926, 0.0
  %934 = vst [vmem:[#allocation2 + $0x8] sm:$0xff] %v930
  %935 = vst [vmem:[#allocation2 + $0x10] sm:$0xff] %v931
  %936 = vst [vmem:[#allocation2 + $0x18] sm:$0xff] %v932
  %937 = vst [vmem:[#allocation2 + $0x20] sm:$0xff] %v933
  %v938 = vld [vmem:[#allocation2] sm:$0xff]
  %v939 = vld [vmem:[#allocation2 + $0x8] sm:$0xff]
  %v940 = vld [vmem:[#allocation2 + $0x10] sm:$0xff]
  %v941 = vld [vmem:[#allocation2 + $0x18] sm:$0xff]
  %v942 = vld [vmem:[#allocation2 + $0x20] sm:$0xff]
  %948 = vrot.lane.b32.xlu0 %v938, 1
  %v949 = vpop.permute.xlu0 %948
  %950 = vrot.lane.b32.xlu0 %v939, 1
  %v951 = vpop.permute.xlu0 %950
  %952 = vrot.lane.b32.xlu0 %v940, 1
  %v953 = vpop.permute.xlu0 %952
  %954 = vrot.lane.b32.xlu0 %v941, 1
  %v955 = vpop.permute.xlu0 %954
  %956 = vrot.lane.b32.xlu0 %v942, 1
  %v957 = vpop.permute.xlu0 %956
  %v958 = vsel %vm116, %v949, %v951
  %v959 = vsel %vm116, %v951, %v953
  %v960 = vsel %vm116, %v953, %v955
  %v961 = vsel %vm116, %v955, %v957
  %v966 = vsel %vm74, 0.0, %v958
  %v967 = vsel %vm75, 0.0, %v959
  %v968 = vsel %vm76, 0.0, %v960
  %v969 = vsel %vm77, 0.0, %v961
  %v970 = vld [vmem:[#allocation2 + $0x8] sm:$0xff]
  %v971 = vld [vmem:[#allocation2 + $0x10] sm:$0xff]
  %v972 = vld [vmem:[#allocation2 + $0x18] sm:$0xff]
  %v973 = vld [vmem:[#allocation2 + $0x20] sm:$0xff]
  %v974 = vld [vmem:[#allocation2 + $0x28] sm:$0xff]
  %980 = vrot.lane.b32.xlu0 %v970, 127
  %v981 = vpop.permute.xlu0 %980
  %982 = vrot.lane.b32.xlu0 %v971, 127
  %v983 = vpop.permute.xlu0 %982
  %984 = vrot.lane.b32.xlu0 %v972, 127
  %v985 = vpop.permute.xlu0 %984
  %986 = vrot.lane.b32.xlu0 %v973, 127
  %v987 = vpop.permute.xlu0 %986
  %988 = vrot.lane.b32.xlu0 %v974, 127
  %v989 = vpop.permute.xlu0 %988
  %v990 = vsel %vm149, %v981, %v983
  %v991 = vsel %vm149, %v983, %v985
  %v992 = vsel %vm149, %v985, %v987
  %v993 = vsel %vm149, %v987, %v989
  %v998 = vsel %vm78, 0.0, %v990
  %v999 = vsel %vm79, 0.0, %v991
  %v1000 = vsel %vm80, 0.0, %v992
  %v1001 = vsel %vm81, 0.0, %v993
  %1002 = vst [vmem:[#allocation3] sm:$0xff] %v966
  %1003 = vst [vmem:[#allocation3 + $0x8] sm:$0xff] %v967
  %1004 = vst [vmem:[#allocation3 + $0x10] sm:$0xff] %v968
  %1005 = vst [vmem:[#allocation3 + $0x18] sm:$0xff] %v969
  %1006 = vst [vmem:[#allocation3 + $0x20] sm:$0xff] %v930
  %1007 = vst [vmem:[#allocation3 + $0x28] sm:$0xff] %v931
  %1008 = vst [vmem:[#allocation3 + $0x30] sm:$0xff] %v932
  %1009 = vst [vmem:[#allocation3 + $0x38] sm:$0xff] %v933
  %1010 = vst [vmem:[#allocation3 + $0x40] sm:$0xff] %v998
  %1011 = vst [vmem:[#allocation3 + $0x48] sm:$0xff] %v999
  %1012 = vst [vmem:[#allocation3 + $0x50] sm:$0xff] %v1000
  %1013 = vst [vmem:[#allocation3 + $0x58] sm:$0xff] %v1001
  %v1014 = vld [vmem:[#allocation3] sm:$0xff]
  %v1015 = vld [vmem:[#allocation3 + $0x8] sm:$0xff]
  %v1016 = vld [vmem:[#allocation3 + $0x10] sm:$0xff]
  %v1017 = vld [vmem:[#allocation3 + $0x18] sm:$0xff]
  %v1018 = vld [vmem:[#allocation3 + $0x20] sm:$0xff]
  %v1019 = vld [vmem:[#allocation3 + $0x28] sm:$0xff]
  %v1020 = vld [vmem:[#allocation3 + $0x30] sm:$0xff]
  %v1021 = vld [vmem:[#allocation3 + $0x38] sm:$0xff]
  %v1022 = vld [vmem:[#allocation3 + $0x40] sm:$0xff]
  %v1023 = vld [vmem:[#allocation3 + $0x48] sm:$0xff]
  %v1024 = vld [vmem:[#allocation3 + $0x50] sm:$0xff]
  %v1025 = vld [vmem:[#allocation3 + $0x58] sm:$0xff]
  %v1026 = vpack.c.bf16 %v1018, %v1014
  %v1027 = vpack.c.bf16 %v1019, %v1015
  %v1028 = vpack.c.bf16 %v1020, %v1016
  %v1029 = vpack.c.bf16 %v1021, %v1017
  %v1030 = vpack.c.bf16 %v1022, %v1022
  %v1031 = vpack.c.bf16 %v1023, %v1023
  %v1032 = vpack.c.bf16 %v1024, %v1024
  %v1033 = vpack.c.bf16 %v1025, %v1025
  %s1034 = scalar_lea.vmem %s1, 16
  %v1035 = vld [vmem:[%s1034] sm:$0xf]
  %s1036 = scalar_lea.vmem %s2, 32
  %v1037 = vld [vmem:[%s1036] sm:$0xff]
  %1039 = vset.pattern.permute.xlu0 0
  %1040 = vperm.xlu0 %1039, %v1037
  %v1041 = vpop.permute.xlu0 %1040
  %v1044 = vsel %vm201, %v1035, 0
  %v1047 = vsel %vm205, %v1030, 0
  %v1050 = vsel %vm205, %v1031, 0
  %v1053 = vsel %vm205, %v1032, 0
  %v1056 = vsel %vm205, %v1033, 0
  %1058 = vmatprep.subr.bf16.mxu0 %v1027
  %1059 = vmatpush1.bf16.msra.mxu0 %v1026
  %1060 = vmatprep.subr.bf16.mxu0 %v1050
  %1061 = vmatpush1.bf16.msra.mxu0 %v1047
  %1062 = vmatprep.subr.bf16.mxu0 0
  %1063 = vmatpush1.bf16.msra.mxu0 0
  %1064 = vmatprep.subr.bf16.mxu0 0
  %1065 = vmatpush1.bf16.msra.mxu0 0
  %1066 = vmatprep.subr.bf16.mxu0 0
  %1067 = vmatpush1.bf16.msra.mxu0 0
  %1068 = vmatprep.subr.bf16.mxu0 0
  %1069 = vmatpush1.bf16.msra.mxu0 0
  %1070 = vmatprep.subr.bf16.mxu0 0
  %1071 = vmatpush1.bf16.msra.mxu0 0
  %1072 = vmatprep.subr.bf16.mxu0 0
  %1073 = vmatpush1.bf16.msra.mxu0 0
  %1074 = vmatprep.subr.bf16.mxu0 0
  %1075 = vmatpush1.bf16.msra.mxu0 0
  %1076 = vmatprep.subr.bf16.mxu0 0
  %1077 = vmatpush1.bf16.msra.mxu0 0
  %1078 = vmatprep.subr.bf16.mxu0 0
  %1079 = vmatpush1.bf16.msra.mxu0 0
  %1080 = vmatprep.subr.bf16.mxu0 0
  %1081 = vmatpush1.bf16.msra.mxu0 0
  %1082 = vmatprep.subr.bf16.mxu0 0
  %1083 = vmatpush1.bf16.msra.mxu0 0
  %1084 = vmatprep.subr.bf16.mxu0 0
  %1085 = vmatpush1.bf16.msra.mxu0 0
  %1086 = vmatprep.subr.bf16.mxu0 0
  %1087 = vmatpush1.bf16.msra.mxu0 0
  %1088 = vmatprep.subr.bf16.mxu0 0
  %1089 = vmatpush1.bf16.msra.mxu0 0
  %1090 = vmatprep.mubr.bf16.mxu0 0
  %1091 = vmatmul.mubr.bf16.gmra.mrb[0].mxu0 %v1044
  %v1092 = vpop.f32.mrb[0].mxu0
  %v1093 = vadd.f32 %v1041, %v1092
  %v1094 = vpop.f32.mrb[0].mxu0
  %v1095 = vadd.f32 %v1041, %v1094
  %v1096 = vpop.f32.mrb[0].mxu0
  %v1097 = vpop.f32.mrb[0].mxu0
  %1098 = vdwg.mxu0
  %1099 = vmatprep.subr.bf16.mxu0 %v1029
  %1100 = vmatpush1.bf16.msra.mxu0 %v1028
  %1101 = vmatprep.subr.bf16.mxu0 %v1056
  %1102 = vmatpush1.bf16.msra.mxu0 %v1053
  %1103 = vmatprep.subr.bf16.mxu0 0
  %1104 = vmatpush1.bf16.msra.mxu0 0
  %1105 = vmatprep.subr.bf16.mxu0 0
  %1106 = vmatpush1.bf16.msra.mxu0 0
  %1107 = vmatprep.subr.bf16.mxu0 0
  %1108 = vmatpush1.bf16.msra.mxu0 0
  %1109 = vmatprep.subr.bf16.mxu0 0
  %1110 = vmatpush1.bf16.msra.mxu0 0
  %1111 = vmatprep.subr.bf16.mxu0 0
  %1112 = vmatpush1.bf16.msra.mxu0 0
  %1113 = vmatprep.subr.bf16.mxu0 0
  %1114 = vmatpush1.bf16.msra.mxu0 0
  %1115 = vmatprep.subr.bf16.mxu0 0
  %1116 = vmatpush1.bf16.msra.mxu0 0
  %1117 = vmatprep.subr.bf16.mxu0 0
  %1118 = vmatpush1.bf16.msra.mxu0 0
  %1119 = vmatprep.subr.bf16.mxu0 0
  %1120 = vmatpush1.bf16.msra.mxu0 0
  %1121 = vmatprep.subr.bf16.mxu0 0
  %1122 = vmatpush1.bf16.msra.mxu0 0
  %1123 = vmatprep.subr.bf16.mxu0 0
  %1124 = vmatpush1.bf16.msra.mxu0 0
  %1125 = vmatprep.subr.bf16.mxu0 0
  %1126 = vmatpush1.bf16.msra.mxu0 0
  %1127 = vmatprep.subr.bf16.mxu0 0
  %1128 = vmatpush1.bf16.msra.mxu0 0
  %1129 = vmatprep.subr.bf16.mxu0 0
  %1130 = vmatpush1.bf16.msra.mxu0 0
  %1131 = vmatprep.mubr.bf16.mxu0 0
  %1132 = vmatmul.mubr.bf16.gmra.mrb[0].mxu0 %v1044
  %v1133 = vpop.f32.mrb[0].mxu0
  %v1134 = vadd.f32 %v1041, %v1133
  %v1135 = vpop.f32.mrb[0].mxu0
  %v1136 = vadd.f32 %v1041, %v1135
  %v1137 = vpop.f32.mrb[0].mxu0
  %v1138 = vpop.f32.mrb[0].mxu0
  %1139 = vdwg.mxu0
  %v1140 = vmax.f32 %v1093, 0.0
  %v1141 = vmax.f32 %v1095, 0.0
  %v1142 = vmax.f32 %v1134, 0.0
  %v1143 = vmax.f32 %v1136, 0.0
  %v1144 = vcombine.high %v1140, 0.0
  %v1146 = vunpack.c.l.s4 1983009808
  %v1147 = vunpack.c.0.s8 %v1146
  %v1148 = vlaneseq
  %v1149 = vshrl.u32 %v1148, 7
  %v1150 = vsub.s32 %v1147, %v1149
  %v1151 = vrot.slane %v1140, %v1150
  %v1153 = vunpack.c.l.s4 1983009808
  %v1154 = vunpack.c.0.s8 %v1153
  %v1155 = vlaneseq
  %v1156 = vshrl.u32 %v1155, 7
  %v1157 = vsub.s32 %v1154, %v1156
  %v1158 = vrot.slane %v1144, %v1157
  %v1159 = vcombine.high %v1142, 0.0
  %v1161 = vunpack.c.l.s4 1983009808
  %v1162 = vunpack.c.0.s8 %v1161
  %v1163 = vlaneseq
  %v1164 = vshrl.u32 %v1163, 7
  %v1165 = vsub.s32 %v1162, %v1164
  %v1166 = vrot.slane %v1142, %v1165
  %v1168 = vunpack.c.l.s4 1983009808
  %v1169 = vunpack.c.0.s8 %v1168
  %v1170 = vlaneseq
  %v1171 = vshrl.u32 %v1170, 7
  %v1172 = vsub.s32 %v1169, %v1171
  %v1173 = vrot.slane %v1159, %v1172
  %v1174 = vcombine.low %v1151, %v1166
  %v1175 = vcombine.high %v1151, %v1166
  %v1177 = vunpack.c.l.s4 1934713408
  %v1178 = vunpack.c.0.s8 %v1177
  %v1179 = vlaneseq
  %v1180 = vshrl.u32 %v1179, 7
  %v1181 = vsub.s32 %v1178, %v1180
  %v1182 = vrot.slane %v1174, %v1181
  %v1184 = vunpack.c.l.s4 1934713408
  %v1185 = vunpack.c.0.s8 %v1184
  %v1186 = vlaneseq
  %v1187 = vshrl.u32 %v1186, 7
  %v1188 = vsub.s32 %v1185, %v1187
  %v1189 = vrot.slane %v1175, %v1188
  %v1190 = vcombine.low %v1158, %v1173
  %v1191 = vcombine.high %v1158, %v1173
  %v1193 = vunpack.c.l.s4 1934713408
  %v1194 = vunpack.c.0.s8 %v1193
  %v1195 = vlaneseq
  %v1196 = vshrl.u32 %v1195, 7
  %v1197 = vsub.s32 %v1194, %v1196
  %v1198 = vrot.slane %v1190, %v1197
  %v1200 = vunpack.c.l.s4 1934713408
  %v1201 = vunpack.c.0.s8 %v1200
  %v1202 = vlaneseq
  %v1203 = vshrl.u32 %v1202, 7
  %v1204 = vsub.s32 %v1201, %v1203
  %v1205 = vrot.slane %v1191, %v1204
  %v1206 = vcombine.high %v1182, 0.0
  %v1207 = vcombine.high %v1189, 0.0
  %v1208 = vcombine.high %v1198, 0.0
  %v1209 = vcombine.high %v1205, 0.0
  %v1210 = vcombine.high %v1141, 0.0
  %v1212 = vunpack.c.l.s4 1983009808
  %v1213 = vunpack.c.0.s8 %v1212
  %v1214 = vlaneseq
  %v1215 = vshrl.u32 %v1214, 7
  %v1216 = vsub.s32 %v1213, %v1215
  %v1217 = vrot.slane %v1141, %v1216
  %v1219 = vunpack.c.l.s4 1983009808
  %v1220 = vunpack.c.0.s8 %v1219
  %v1221 = vlaneseq
  %v1222 = vshrl.u32 %v1221, 7
  %v1223 = vsub.s32 %v1220, %v1222
  %v1224 = vrot.slane %v1210, %v1223
  %v1225 = vcombine.high %v1143, 0.0
  %v1227 = vunpack.c.l.s4 1983009808
  %v1228 = vunpack.c.0.s8 %v1227
  %v1229 = vlaneseq
  %v1230 = vshrl.u32 %v1229, 7
  %v1231 = vsub.s32 %v1228, %v1230
  %v1232 = vrot.slane %v1143, %v1231
  %v1234 = vunpack.c.l.s4 1983009808
  %v1235 = vunpack.c.0.s8 %v1234
  %v1236 = vlaneseq
  %v1237 = vshrl.u32 %v1236, 7
  %v1238 = vsub.s32 %v1235, %v1237
  %v1239 = vrot.slane %v1225, %v1238
  %v1240 = vcombine.low %v1217, %v1232
  %v1241 = vcombine.high %v1217, %v1232
  %v1243 = vunpack.c.l.s4 1934713408
  %v1244 = vunpack.c.0.s8 %v1243
  %v1245 = vlaneseq
  %v1246 = vshrl.u32 %v1245, 7
  %v1247 = vsub.s32 %v1244, %v1246
  %v1248 = vrot.slane %v1240, %v1247
  %v1250 = vunpack.c.l.s4 1934713408
  %v1251 = vunpack.c.0.s8 %v1250
  %v1252 = vlaneseq
  %v1253 = vshrl.u32 %v1252, 7
  %v1254 = vsub.s32 %v1251, %v1253
  %v1255 = vrot.slane %v1241, %v1254
  %v1256 = vcombine.low %v1224, %v1239
  %v1257 = vcombine.high %v1224, %v1239
  %v1259 = vunpack.c.l.s4 1934713408
  %v1260 = vunpack.c.0.s8 %v1259
  %v1261 = vlaneseq
  %v1262 = vshrl.u32 %v1261, 7
  %v1263 = vsub.s32 %v1260, %v1262
  %v1264 = vrot.slane %v1256, %v1263
  %v1266 = vunpack.c.l.s4 1934713408
  %v1267 = vunpack.c.0.s8 %v1266
  %v1268 = vlaneseq
  %v1269 = vshrl.u32 %v1268, 7
  %v1270 = vsub.s32 %v1267, %v1269
  %v1271 = vrot.slane %v1257, %v1270
  %v1272 = vcombine.high %v1248, 0.0
  %v1273 = vcombine.high %v1255, 0.0
  %v1274 = vcombine.high %v1264, 0.0
  %v1275 = vcombine.high %v1271, 0.0
  %v1276 = vpack.c.bf16 %v1182, %v1182
  %v1277 = vpack.c.bf16 %v1248, %v1248
  %v1278 = vpack.c.bf16 %v1206, %v1206
  %v1279 = vpack.c.bf16 %v1272, %v1272
  %v1280 = vpack.c.bf16 %v1189, %v1189
  %v1281 = vpack.c.bf16 %v1255, %v1255
  %v1282 = vpack.c.bf16 %v1207, %v1207
  %v1283 = vpack.c.bf16 %v1273, %v1273
  %v1284 = vpack.c.bf16 %v1198, %v1198
  %v1285 = vpack.c.bf16 %v1264, %v1264
  %v1286 = vpack.c.bf16 %v1208, %v1208
  %v1287 = vpack.c.bf16 %v1274, %v1274
  %v1288 = vpack.c.bf16 %v1205, %v1205
  %v1289 = vpack.c.bf16 %v1271, %v1271
  %v1290 = vpack.c.bf16 %v1209, %v1209
  %v1291 = vpack.c.bf16 %v1275, %v1275
  %v1292 = vld [vmem:[%s3] sm:$0xff]
  %v1293 = vld [vmem:[%s3 + $0x8] sm:$0xff]
  %v1294 = vld [vmem:[%s3 + $0x10] sm:$0x33]
  %v1295 = vld [vmem:[%s3 + $0x18] sm:$0xff]
  %v1296 = vld [vmem:[%s3 + $0x20] sm:$0xff]
  %v1297 = vld [vmem:[%s3 + $0x28] sm:$0x33]
  %v1298 = vld [vmem:[%s3 + $0x30] sm:$0xff]
  %v1299 = vld [vmem:[%s3 + $0x38] sm:$0xff]
  %v1300 = vld [vmem:[%s3 + $0x40] sm:$0x33]
  %v1301 = vld [vmem:[%s3 + $0x48] sm:$0xff]
  %v1302 = vld [vmem:[%s3 + $0x50] sm:$0xff]
  %v1303 = vld [vmem:[%s3 + $0x58] sm:$0x33]
  %v1304 = vld [vmem:[%s3 + $0x60] sm:$0xff]
  %v1305 = vld [vmem:[%s3 + $0x68] sm:$0xff]
  %v1306 = vld [vmem:[%s3 + $0x70] sm:$0x33]
  %v1307 = vld [vmem:[%s3 + $0x78] sm:$0xff]
  %v1308 = vld [vmem:[%s3 + $0x80] sm:$0xff]
  %v1309 = vld [vmem:[%s3 + $0x88] sm:$0x33]
  %v1310 = vld [vmem:[%s3 + $0x90] sm:$0xff]
  %v1311 = vld [vmem:[%s3 + $0x98] sm:$0xff]
  %v1312 = vld [vmem:[%s3 + $0xa0] sm:$0x33]
  %v1313 = vld [vmem:[%s3 + $0xa8] sm:$0xff]
  %v1314 = vld [vmem:[%s3 + $0xb0] sm:$0xff]
  %v1315 = vld [vmem:[%s3 + $0xb8] sm:$0x33]
  %v1319 = vunpack.c.l.b16 %v1292
  %v1320 = vunpack.c.h.b16 %v1292
  %v1321 = vunpack.c.l.b16 %v1293
  %v1322 = vunpack.c.h.b16 %v1293
  %v1323 = vunpack.c.l.b16 %v1294
  %v1324 = vunpack.c.h.b16 %v1294
  %v1325 = vpack.c.b16 %v1321, %v1319
  %v1326 = vpack.c.b16 %v1322, %v1320
  %v1327 = vpack.c.b16 %v1323, %v1323
  %v1328 = vpack.c.b16 %v1324, %v1324
  %1333 = vmatprep.subr.bf16.mxu0 %v1326
  %1334 = vmatpush1.bf16.xpose.msra.mxu0 %v1325
  %1335 = vmatprep.subr.bf16.mxu0 %v1328
  %1336 = vmatpush1.bf16.xpose.msra.mxu0 %v1327
  %1337 = vmatprep.subr.bf16.mxu0 0
  %1338 = vmatpush1.bf16.xpose.msra.mxu0 0
  %1339 = vmatprep.subr.bf16.mxu0 0
  %1340 = vmatpush1.bf16.xpose.msra.mxu0 0
  %1341 = vmatprep.subr.bf16.mxu0 0
  %1342 = vmatpush1.bf16.xpose.msra.mxu0 0
  %1343 = vmatprep.subr.bf16.mxu0 0
  %1344 = vmatpush1.bf16.xpose.msra.mxu0 0
  %1345 = vmatprep.subr.bf16.mxu0 0
  %1346 = vmatpush1.bf16.xpose.msra.mxu0 0
  %1347 = vmatprep.subr.bf16.mxu0 0
  %1348 = vmatpush1.bf16.xpose.msra.mxu0 0
  %1349 = vmatprep.subr.bf16.mxu0 0
  %1350 = vmatpush1.bf16.xpose.msra.mxu0 0
  %1351 = vmatprep.subr.bf16.mxu0 0
  %1352 = vmatpush1.bf16.xpose.msra.mxu0 0
  %1353 = vmatprep.subr.bf16.mxu0 0
  %1354 = vmatpush1.bf16.xpose.msra.mxu0 0
  %1355 = vmatprep.subr.bf16.mxu0 0
  %1356 = vmatpush1.bf16.xpose.msra.mxu0 0
  %1357 = vmatprep.subr.bf16.mxu0 0
  %1358 = vmatpush1.bf16.xpose.msra.mxu0 0
  %1359 = vmatprep.subr.bf16.mxu0 0
  %1360 = vmatpush1.bf16.xpose.msra.mxu0 0
  %1361 = vmatprep.subr.bf16.mxu0 0
  %1362 = vmatpush1.bf16.xpose.msra.mxu0 0
  %1363 = vmatprep.subr.bf16.mxu0 0
  %1364 = vmatpush1.bf16.xpose.msra.mxu0 0
  %1365 = vmatprep.mubr.bf16.mxu0 %v1277
  %1366 = vmatmul.mubr.bf16.gmra.mrb[0].mxu0 %v1276
  %v1367 = vpop.f32.mrb[0].mxu0
  %v1368 = vadd.f32 0.0, %v1367
  %v1369 = vpop.f32.mrb[0].mxu0
  %v1370 = vpop.f32.mrb[0].mxu0
  %v1371 = vpop.f32.mrb[0].mxu0
  %1372 = vdwg.mxu0
  %v1376 = vunpack.c.l.b16 %v1295
  %v1377 = vunpack.c.h.b16 %v1295
  %v1378 = vunpack.c.l.b16 %v1296
  %v1379 = vunpack.c.h.b16 %v1296
  %v1380 = vunpack.c.l.b16 %v1297
  %v1381 = vunpack.c.h.b16 %v1297
  %v1382 = vpack.c.b16 %v1378, %v1376
  %v1383 = vpack.c.b16 %v1379, %v1377
  %v1384 = vpack.c.b16 %v1380, %v1380
  %v1385 = vpack.c.b16 %v1381, %v1381
  %1390 = vmatprep.subr.bf16.mxu0 %v1383
  %1391 = vmatpush1.bf16.xpose.msra.mxu0 %v1382
  %1392 = vmatprep.subr.bf16.mxu0 %v1385
  %1393 = vmatpush1.bf16.xpose.msra.mxu0 %v1384
  %1394 = vmatprep.subr.bf16.mxu0 0
  %1395 = vmatpush1.bf16.xpose.msra.mxu0 0
  %1396 = vmatprep.subr.bf16.mxu0 0
  %1397 = vmatpush1.bf16.xpose.msra.mxu0 0
  %1398 = vmatprep.subr.bf16.mxu0 0
  %1399 = vmatpush1.bf16.xpose.msra.mxu0 0
  %1400 = vmatprep.subr.bf16.mxu0 0
  %1401 = vmatpush1.bf16.xpose.msra.mxu0 0
  %1402 = vmatprep.subr.bf16.mxu0 0
  %1403 = vmatpush1.bf16.xpose.msra.mxu0 0
  %1404 = vmatprep.subr.bf16.mxu0 0
  %1405 = vmatpush1.bf16.xpose.msra.mxu0 0
  %1406 = vmatprep.subr.bf16.mxu0 0
  %1407 = vmatpush1.bf16.xpose.msra.mxu0 0
  %1408 = vmatprep.subr.bf16.mxu0 0
  %1409 = vmatpush1.bf16.xpose.msra.mxu0 0
  %1410 = vmatprep.subr.bf16.mxu0 0
  %1411 = vmatpush1.bf16.xpose.msra.mxu0 0
  %1412 = vmatprep.subr.bf16.mxu0 0
  %1413 = vmatpush1.bf16.xpose.msra.mxu0 0
  %1414 = vmatprep.subr.bf16.mxu0 0
  %1415 = vmatpush1.bf16.xpose.msra.mxu0 0
  %1416 = vmatprep.subr.bf16.mxu0 0
  %1417 = vmatpush1.bf16.xpose.msra.mxu0 0
  %1418 = vmatprep.subr.bf16.mxu0 0
  %1419 = vmatpush1.bf16.xpose.msra.mxu0 0
  %1420 = vmatprep.subr.bf16.mxu0 0
  %1421 = vmatpush1.bf16.xpose.msra.mxu0 0
  %1422 = vmatprep.mubr.bf16.mxu0 %v1279
  %1423 = vmatmul.mubr.bf16.gmra.mrb[0].mxu0 %v1278
  %v1424 = vpop.f32.mrb[0].mxu0
  %v1425 = vadd.f32 0.0, %v1424
  %v1426 = vpop.f32.mrb[0].mxu0
  %v1427 = vpop.f32.mrb[0].mxu0
  %v1428 = vpop.f32.mrb[0].mxu0
  %1429 = vdwg.mxu0
  %v1433 = vunpack.c.l.b16 %v1298
  %v1434 = vunpack.c.h.b16 %v1298
  %v1435 = vunpack.c.l.b16 %v1299
  %v1436 = vunpack.c.h.b16 %v1299
  %v1437 = vunpack.c.l.b16 %v1300
  %v1438 = vunpack.c.h.b16 %v1300
  %v1439 = vpack.c.b16 %v1435, %v1433
  %v1440 = vpack.c.b16 %v1436, %v1434
  %v1441 = vpack.c.b16 %v1437, %v1437
  %v1442 = vpack.c.b16 %v1438, %v1438
  %1447 = vmatprep.subr.bf16.mxu0 %v1440
  %1448 = vmatpush1.bf16.xpose.msra.mxu0 %v1439
  %1449 = vmatprep.subr.bf16.mxu0 %v1442
  %1450 = vmatpush1.bf16.xpose.msra.mxu0 %v1441
  %1451 = vmatprep.subr.bf16.mxu0 0
  %1452 = vmatpush1.bf16.xpose.msra.mxu0 0
  %1453 = vmatprep.subr.bf16.mxu0 0
  %1454 = vmatpush1.bf16.xpose.msra.mxu0 0
  %1455 = vmatprep.subr.bf16.mxu0 0
  %1456 = vmatpush1.bf16.xpose.msra.mxu0 0
  %1457 = vmatprep.subr.bf16.mxu0 0
  %1458 = vmatpush1.bf16.xpose.msra.mxu0 0
  %1459 = vmatprep.subr.bf16.mxu0 0
  %1460 = vmatpush1.bf16.xpose.msra.mxu0 0
  %1461 = vmatprep.subr.bf16.mxu0 0
  %1462 = vmatpush1.bf16.xpose.msra.mxu0 0
  %1463 = vmatprep.subr.bf16.mxu0 0
  %1464 = vmatpush1.bf16.xpose.msra.mxu0 0
  %1465 = vmatprep.subr.bf16.mxu0 0
  %1466 = vmatpush1.bf16.xpose.msra.mxu0 0
  %1467 = vmatprep.subr.bf16.mxu0 0
  %1468 = vmatpush1.bf16.xpose.msra.mxu0 0
  %1469 = vmatprep.subr.bf16.mxu0 0
  %1470 = vmatpush1.bf16.xpose.msra.mxu0 0
  %1471 = vmatprep.subr.bf16.mxu0 0
  %1472 = vmatpush1.bf16.xpose.msra.mxu0 0
  %1473 = vmatprep.subr.bf16.mxu0 0
  %1474 = vmatpush1.bf16.xpose.msra.mxu0 0
  %1475 = vmatprep.subr.bf16.mxu0 0
  %1476 = vmatpush1.bf16.xpose.msra.mxu0 0
  %1477 = vmatprep.subr.bf16.mxu0 0
  %1478 = vmatpush1.bf16.xpose.msra.mxu0 0
  %1479 = vmatprep.mubr.bf16.mxu0 %v1281
  %1480 = vmatmul.mubr.bf16.gmra.mrb[0].mxu0 %v1280
  %v1481 = vpop.f32.mrb[0].mxu0
  %v1482 = vadd.f32 0.0, %v1481
  %v1483 = vpop.f32.mrb[0].mxu0
  %v1484 = vpop.f32.mrb[0].mxu0
  %v1485 = vpop.f32.mrb[0].mxu0
  %1486 = vdwg.mxu0
  %v1490 = vunpack.c.l.b16 %v1301
  %v1491 = vunpack.c.h.b16 %v1301
  %v1492 = vunpack.c.l.b16 %v1302
  %v1493 = vunpack.c.h.b16 %v1302
  %v1494 = vunpack.c.l.b16 %v1303
  %v1495 = vunpack.c.h.b16 %v1303
  %v1496 = vpack.c.b16 %v1492, %v1490
  %v1497 = vpack.c.b16 %v1493, %v1491
  %v1498 = vpack.c.b16 %v1494, %v1494
  %v1499 = vpack.c.b16 %v1495, %v1495
  %1504 = vmatprep.subr.bf16.mxu0 %v1497
  %1505 = vmatpush1.bf16.xpose.msra.mxu0 %v1496
  %1506 = vmatprep.subr.bf16.mxu0 %v1499
  %1507 = vmatpush1.bf16.xpose.msra.mxu0 %v1498
  %1508 = vmatprep.subr.bf16.mxu0 0
  %1509 = vmatpush1.bf16.xpose.msra.mxu0 0
  %1510 = vmatprep.subr.bf16.mxu0 0
  %1511 = vmatpush1.bf16.xpose.msra.mxu0 0
  %1512 = vmatprep.subr.bf16.mxu0 0
  %1513 = vmatpush1.bf16.xpose.msra.mxu0 0
  %1514 = vmatprep.subr.bf16.mxu0 0
  %1515 = vmatpush1.bf16.xpose.msra.mxu0 0
  %1516 = vmatprep.subr.bf16.mxu0 0
  %1517 = vmatpush1.bf16.xpose.msra.mxu0 0
  %1518 = vmatprep.subr.bf16.mxu0 0
  %1519 = vmatpush1.bf16.xpose.msra.mxu0 0
  %1520 = vmatprep.subr.bf16.mxu0 0
  %1521 = vmatpush1.bf16.xpose.msra.mxu0 0
  %1522 = vmatprep.subr.bf16.mxu0 0
  %1523 = vmatpush1.bf16.xpose.msra.mxu0 0
  %1524 = vmatprep.subr.bf16.mxu0 0
  %1525 = vmatpush1.bf16.xpose.msra.mxu0 0
  %1526 = vmatprep.subr.bf16.mxu0 0
  %1527 = vmatpush1.bf16.xpose.msra.mxu0 0
  %1528 = vmatprep.subr.bf16.mxu0 0
  %1529 = vmatpush1.bf16.xpose.msra.mxu0 0
  %1530 = vmatprep.subr.bf16.mxu0 0
  %1531 = vmatpush1.bf16.xpose.msra.mxu0 0
  %1532 = vmatprep.subr.bf16.mxu0 0
  %1533 = vmatpush1.bf16.xpose.msra.mxu0 0
  %1534 = vmatprep.subr.bf16.mxu0 0
  %1535 = vmatpush1.bf16.xpose.msra.mxu0 0
  %1536 = vmatprep.mubr.bf16.mxu0 %v1283
  %1537 = vmatmul.mubr.bf16.gmra.mrb[0].mxu0 %v1282
  %v1538 = vpop.f32.mrb[0].mxu0
  %v1539 = vadd.f32 0.0, %v1538
  %v1540 = vpop.f32.mrb[0].mxu0
  %v1541 = vpop.f32.mrb[0].mxu0
  %v1542 = vpop.f32.mrb[0].mxu0
  %1543 = vdwg.mxu0
  %v1547 = vunpack.c.l.b16 %v1304
  %v1548 = vunpack.c.h.b16 %v1304
  %v1549 = vunpack.c.l.b16 %v1305
  %v1550 = vunpack.c.h.b16 %v1305
  %v1551 = vunpack.c.l.b16 %v1306
  %v1552 = vunpack.c.h.b16 %v1306
  %v1553 = vpack.c.b16 %v1549, %v1547
  %v1554 = vpack.c.b16 %v1550, %v1548
  %v1555 = vpack.c.b16 %v1551, %v1551
  %v1556 = vpack.c.b16 %v1552, %v1552
  %1561 = vmatprep.subr.bf16.mxu0 %v1554
  %1562 = vmatpush1.bf16.xpose.msra.mxu0 %v1553
  %1563 = vmatprep.subr.bf16.mxu0 %v1556
  %1564 = vmatpush1.bf16.xpose.msra.mxu0 %v1555
  %1565 = vmatprep.subr.bf16.mxu0 0
  %1566 = vmatpush1.bf16.xpose.msra.mxu0 0
  %1567 = vmatprep.subr.bf16.mxu0 0
  %1568 = vmatpush1.bf16.xpose.msra.mxu0 0
  %1569 = vmatprep.subr.bf16.mxu0 0
  %1570 = vmatpush1.bf16.xpose.msra.mxu0 0
  %1571 = vmatprep.subr.bf16.mxu0 0
  %1572 = vmatpush1.bf16.xpose.msra.mxu0 0
  %1573 = vmatprep.subr.bf16.mxu0 0
  %1574 = vmatpush1.bf16.xpose.msra.mxu0 0
  %1575 = vmatprep.subr.bf16.mxu0 0
  %1576 = vmatpush1.bf16.xpose.msra.mxu0 0
  %1577 = vmatprep.subr.bf16.mxu0 0
  %1578 = vmatpush1.bf16.xpose.msra.mxu0 0
  %1579 = vmatprep.subr.bf16.mxu0 0
  %1580 = vmatpush1.bf16.xpose.msra.mxu0 0
  %1581 = vmatprep.subr.bf16.mxu0 0
  %1582 = vmatpush1.bf16.xpose.msra.mxu0 0
  %1583 = vmatprep.subr.bf16.mxu0 0
  %1584 = vmatpush1.bf16.xpose.msra.mxu0 0
  %1585 = vmatprep.subr.bf16.mxu0 0
  %1586 = vmatpush1.bf16.xpose.msra.mxu0 0
  %1587 = vmatprep.subr.bf16.mxu0 0
  %1588 = vmatpush1.bf16.xpose.msra.mxu0 0
  %1589 = vmatprep.subr.bf16.mxu0 0
  %1590 = vmatpush1.bf16.xpose.msra.mxu0 0
  %1591 = vmatprep.subr.bf16.mxu0 0
  %1592 = vmatpush1.bf16.xpose.msra.mxu0 0
  %1593 = vmatprep.mubr.bf16.mxu0 %v1285
  %1594 = vmatmul.mubr.bf16.gmra.mrb[0].mxu0 %v1284
  %v1595 = vpop.f32.mrb[0].mxu0
  %v1596 = vadd.f32 0.0, %v1595
  %v1597 = vpop.f32.mrb[0].mxu0
  %v1598 = vpop.f32.mrb[0].mxu0
  %v1599 = vpop.f32.mrb[0].mxu0
  %1600 = vdwg.mxu0
  %v1604 = vunpack.c.l.b16 %v1307
  %v1605 = vunpack.c.h.b16 %v1307
  %v1606 = vunpack.c.l.b16 %v1308
  %v1607 = vunpack.c.h.b16 %v1308
  %v1608 = vunpack.c.l.b16 %v1309
  %v1609 = vunpack.c.h.b16 %v1309
  %v1610 = vpack.c.b16 %v1606, %v1604
  %v1611 = vpack.c.b16 %v1607, %v1605
  %v1612 = vpack.c.b16 %v1608, %v1608
  %v1613 = vpack.c.b16 %v1609, %v1609
  %1618 = vmatprep.subr.bf16.mxu0 %v1611
  %1619 = vmatpush1.bf16.xpose.msra.mxu0 %v1610
  %1620 = vmatprep.subr.bf16.mxu0 %v1613
  %1621 = vmatpush1.bf16.xpose.msra.mxu0 %v1612
  %1622 = vmatprep.subr.bf16.mxu0 0
  %1623 = vmatpush1.bf16.xpose.msra.mxu0 0
  %1624 = vmatprep.subr.bf16.mxu0 0
  %1625 = vmatpush1.bf16.xpose.msra.mxu0 0
  %1626 = vmatprep.subr.bf16.mxu0 0
  %1627 = vmatpush1.bf16.xpose.msra.mxu0 0
  %1628 = vmatprep.subr.bf16.mxu0 0
  %1629 = vmatpush1.bf16.xpose.msra.mxu0 0
  %1630 = vmatprep.subr.bf16.mxu0 0
  %1631 = vmatpush1.bf16.xpose.msra.mxu0 0
  %1632 = vmatprep.subr.bf16.mxu0 0
  %1633 = vmatpush1.bf16.xpose.msra.mxu0 0
  %1634 = vmatprep.subr.bf16.mxu0 0
  %1635 = vmatpush1.bf16.xpose.msra.mxu0 0
  %1636 = vmatprep.subr.bf16.mxu0 0
  %1637 = vmatpush1.bf16.xpose.msra.mxu0 0
  %1638 = vmatprep.subr.bf16.mxu0 0
  %1639 = vmatpush1.bf16.xpose.msra.mxu0 0
  %1640 = vmatprep.subr.bf16.mxu0 0
  %1641 = vmatpush1.bf16.xpose.msra.mxu0 0
  %1642 = vmatprep.subr.bf16.mxu0 0
  %1643 = vmatpush1.bf16.xpose.msra.mxu0 0
  %1644 = vmatprep.subr.bf16.mxu0 0
  %1645 = vmatpush1.bf16.xpose.msra.mxu0 0
  %1646 = vmatprep.subr.bf16.mxu0 0
  %1647 = vmatpush1.bf16.xpose.msra.mxu0 0
  %1648 = vmatprep.subr.bf16.mxu0 0
  %1649 = vmatpush1.bf16.xpose.msra.mxu0 0
  %1650 = vmatprep.mubr.bf16.mxu0 %v1287
  %1651 = vmatmul.mubr.bf16.gmra.mrb[0].mxu0 %v1286
  %v1652 = vpop.f32.mrb[0].mxu0
  %v1653 = vadd.f32 0.0, %v1652
  %v1654 = vpop.f32.mrb[0].mxu0
  %v1655 = vpop.f32.mrb[0].mxu0
  %v1656 = vpop.f32.mrb[0].mxu0
  %1657 = vdwg.mxu0
  %v1661 = vunpack.c.l.b16 %v1310
  %v1662 = vunpack.c.h.b16 %v1310
  %v1663 = vunpack.c.l.b16 %v1311
  %v1664 = vunpack.c.h.b16 %v1311
  %v1665 = vunpack.c.l.b16 %v1312
  %v1666 = vunpack.c.h.b16 %v1312
  %v1667 = vpack.c.b16 %v1663, %v1661
  %v1668 = vpack.c.b16 %v1664, %v1662
  %v1669 = vpack.c.b16 %v1665, %v1665
  %v1670 = vpack.c.b16 %v1666, %v1666
  %1675 = vmatprep.subr.bf16.mxu0 %v1668
  %1676 = vmatpush1.bf16.xpose.msra.mxu0 %v1667
  %1677 = vmatprep.subr.bf16.mxu0 %v1670
  %1678 = vmatpush1.bf16.xpose.msra.mxu0 %v1669
  %1679 = vmatprep.subr.bf16.mxu0 0
  %1680 = vmatpush1.bf16.xpose.msra.mxu0 0
  %1681 = vmatprep.subr.bf16.mxu0 0
  %1682 = vmatpush1.bf16.xpose.msra.mxu0 0
  %1683 = vmatprep.subr.bf16.mxu0 0
  %1684 = vmatpush1.bf16.xpose.msra.mxu0 0
  %1685 = vmatprep.subr.bf16.mxu0 0
  %1686 = vmatpush1.bf16.xpose.msra.mxu0 0
  %1687 = vmatprep.subr.bf16.mxu0 0
  %1688 = vmatpush1.bf16.xpose.msra.mxu0 0
  %1689 = vmatprep.subr.bf16.mxu0 0
  %1690 = vmatpush1.bf16.xpose.msra.mxu0 0
  %1691 = vmatprep.subr.bf16.mxu0 0
  %1692 = vmatpush1.bf16.xpose.msra.mxu0 0
  %1693 = vmatprep.subr.bf16.mxu0 0
  %1694 = vmatpush1.bf16.xpose.msra.mxu0 0
  %1695 = vmatprep.subr.bf16.mxu0 0
  %1696 = vmatpush1.bf16.xpose.msra.mxu0 0
  %1697 = vmatprep.subr.bf16.mxu0 0
  %1698 = vmatpush1.bf16.xpose.msra.mxu0 0
  %1699 = vmatprep.subr.bf16.mxu0 0
  %1700 = vmatpush1.bf16.xpose.msra.mxu0 0
  %1701 = vmatprep.subr.bf16.mxu0 0
  %1702 = vmatpush1.bf16.xpose.msra.mxu0 0
  %1703 = vmatprep.subr.bf16.mxu0 0
  %1704 = vmatpush1.bf16.xpose.msra.mxu0 0
  %1705 = vmatprep.subr.bf16.mxu0 0
  %1706 = vmatpush1.bf16.xpose.msra.mxu0 0
  %1707 = vmatprep.mubr.bf16.mxu0 %v1289
  %1708 = vmatmul.mubr.bf16.gmra.mrb[0].mxu0 %v1288
  %v1709 = vpop.f32.mrb[0].mxu0
  %v1710 = vadd.f32 0.0, %v1709
  %v1711 = vpop.f32.mrb[0].mxu0
  %v1712 = vpop.f32.mrb[0].mxu0
  %v1713 = vpop.f32.mrb[0].mxu0
  %1714 = vdwg.mxu0
  %v1718 = vunpack.c.l.b16 %v1313
  %v1719 = vunpack.c.h.b16 %v1313
  %v1720 = vunpack.c.l.b16 %v1314
  %v1721 = vunpack.c.h.b16 %v1314
  %v1722 = vunpack.c.l.b16 %v1315
  %v1723 = vunpack.c.h.b16 %v1315
  %v1724 = vpack.c.b16 %v1720, %v1718
  %v1725 = vpack.c.b16 %v1721, %v1719
  %v1726 = vpack.c.b16 %v1722, %v1722
  %v1727 = vpack.c.b16 %v1723, %v1723
  %1732 = vmatprep.subr.bf16.mxu0 %v1725
  %1733 = vmatpush1.bf16.xpose.msra.mxu0 %v1724
  %1734 = vmatprep.subr.bf16.mxu0 %v1727
  %1735 = vmatpush1.bf16.xpose.msra.mxu0 %v1726
  %1736 = vmatprep.subr.bf16.mxu0 0
  %1737 = vmatpush1.bf16.xpose.msra.mxu0 0
  %1738 = vmatprep.subr.bf16.mxu0 0
  %1739 = vmatpush1.bf16.xpose.msra.mxu0 0
  %1740 = vmatprep.subr.bf16.mxu0 0
  %1741 = vmatpush1.bf16.xpose.msra.mxu0 0
  %1742 = vmatprep.subr.bf16.mxu0 0
  %1743 = vmatpush1.bf16.xpose.msra.mxu0 0
  %1744 = vmatprep.subr.bf16.mxu0 0
  %1745 = vmatpush1.bf16.xpose.msra.mxu0 0
  %1746 = vmatprep.subr.bf16.mxu0 0
  %1747 = vmatpush1.bf16.xpose.msra.mxu0 0
  %1748 = vmatprep.subr.bf16.mxu0 0
  %1749 = vmatpush1.bf16.xpose.msra.mxu0 0
  %1750 = vmatprep.subr.bf16.mxu0 0
  %1751 = vmatpush1.bf16.xpose.msra.mxu0 0
  %1752 = vmatprep.subr.bf16.mxu0 0
  %1753 = vmatpush1.bf16.xpose.msra.mxu0 0
  %1754 = vmatprep.subr.bf16.mxu0 0
  %1755 = vmatpush1.bf16.xpose.msra.mxu0 0
  %1756 = vmatprep.subr.bf16.mxu0 0
  %1757 = vmatpush1.bf16.xpose.msra.mxu0 0
  %1758 = vmatprep.subr.bf16.mxu0 0
  %1759 = vmatpush1.bf16.xpose.msra.mxu0 0
  %1760 = vmatprep.subr.bf16.mxu0 0
  %1761 = vmatpush1.bf16.xpose.msra.mxu0 0
  %1762 = vmatprep.subr.bf16.mxu0 0
  %1763 = vmatpush1.bf16.xpose.msra.mxu0 0
  %1764 = vmatprep.mubr.bf16.mxu0 %v1291
  %1765 = vmatmul.mubr.bf16.gmra.mrb[0].mxu0 %v1290
  %v1766 = vpop.f32.mrb[0].mxu0
  %v1767 = vadd.f32 0.0, %v1766
  %v1768 = vpop.f32.mrb[0].mxu0
  %v1769 = vpop.f32.mrb[0].mxu0
  %v1770 = vpop.f32.mrb[0].mxu0
  %1771 = vdwg.mxu0
  %vm1772 = vcmask 156672
  %v1773 = vsel %vm1772, %v1368, 0.0
  %v1774 = vsel %vm1772, %v1425, 0.0
  %v1775 = vadd.f32 %v1773, %v1774
  %v1776 = vsel %vm1772, %v1482, 0.0
  %v1777 = vadd.f32 %v1775, %v1776
  %v1778 = vsel %vm1772, %v1539, 0.0
  %v1779 = vadd.f32 %v1777, %v1778
  %v1780 = vsel %vm1772, %v1596, 0.0
  %v1781 = vadd.f32 %v1779, %v1780
  %v1782 = vsel %vm1772, %v1653, 0.0
  %v1783 = vadd.f32 %v1781, %v1782
  %v1784 = vsel %vm1772, %v1710, 0.0
  %v1785 = vadd.f32 %v1783, %v1784
  %v1786 = vsel %vm1772, %v1767, 0.0
  %v1787 = vadd.f32 %v1785, %v1786
  %v1788 = vld [vmem:[%s4] sm:$0x1]
  %v1789 = vlaneseq
  %v1790 = vshrl.u32 %v1789, 7
  %v1791 = vsub.s32 0, %v1790
  %v1792 = vrot.slane %v1788, %v1791
  %v1793 = vadd.f32 %v1787, %v1792
  %v1794 = vmax.f32 %v1793, 0.0
  %v1795 = vld [vmem:[%s4 + $0x1] sm:$0x1]
  %v1796 = vlaneseq
  %v1797 = vshrl.u32 %v1796, 7
  %v1798 = vsub.s32 0, %v1797
  %v1799 = vrot.slane %v1795, %v1798
  %v1800 = vmul.f32 %v1794, %v1799
  %v1801 = vsel %vm1772, %v1800, 0.0
  %1802 = vadd.xlane.f32.xlu0 %v1801
  %v1803 = vpop.xlane.xlu0 %1802
  %v1804 = vld [vmem:[%s4 + $0x2] sm:$0x1]
  %v1805 = vlaneseq
  %v1806 = vshrl.u32 %v1805, 7
  %v1807 = vsub.s32 0, %v1806
  %v1808 = vrot.slane %v1804, %v1807
  %v1809 = vadd.f32 %v1803, %v1808
  %vm1810 = vcmask 1024
  %1811 = vst.msk [vmem:[%s5] sm:$0x3] %vm1810, %v1809
  // Predicated region
  $region22: #{tpu_custom_call.1} parent=0 // pred_check
    _
  $region23: #{tpu_custom_call.1} parent=0 // pred_check_branch
    %1813 = sbr.rel (0) target = $region25
  $region24: #{tpu_custom_call.1} parent=0 // pred_region
    _
  $region25: #{tpu_custom_call.1} parent=0 // pred_fallthru
    _
  // Predicated region
  $region26: #{tpu_custom_call.1} parent=0 // pred_check
    _
  $region27: #{tpu_custom_call.1} parent=0 // pred_check_branch
    %1815 = sbr.rel (0) target = $region29
  $region28: #{tpu_custom_call.1} parent=0 // pred_region
    _
  $region29: #{tpu_custom_call.1} parent=0 // pred_fallthru
    _

</llo_original>
